<compile_context>
chip_gen: v5e
topology: v5e:2x2
jax: 0.10.0
libtpu: 0.0.40
codegen_flags: <defaults>
</compile_context>

<pallas_src>
import functools

import jax
import jax.numpy as jnp
from jax import lax
from jax.experimental import pallas as pl
from jax.experimental.pallas import tpu as pltpu

_SUB = 8  # native sublane height; channel dims are padded to this


# ---------------------------------------------------------------------------
# Fused kernel (one block of images packed along the lane dim)
# ---------------------------------------------------------------------------
def _residual_block_kernel(x_ref, w1_ref, w2_ref, s1_ref, t1_ref, s2_ref,
                           t2_ref, mask_ref, sel_ref, o_ref, *, W, L):
    x = x_ref[...]                                       # (8, L) f32

    def conv3x3(xin, w_ref):
        # ONE MXU matmul for all 9 taps: (9*8, 8) @ (8, L) -> (72, L) f32.
        y = jnp.dot(w_ref[...], xin.astype(jnp.bfloat16),
                    preferred_element_type=jnp.float32)
        acc = None
        for t in range(9):
            ky, kx = divmod(t, 3)
            tap = y[8 * t:8 * t + 8, :]                  # sublane-aligned slice
            s = (ky - 1) * W + (kx - 1)
            if s != 0:
                # tap'[.., p] = tap[.., p + s] (jnp.roll semantics), then zero
                # lanes whose 3x3 neighbour falls outside its own image.
                tap = pltpu.roll(tap, shift=(-s) % L, axis=1)
                tap = tap * mask_ref[8 * t:8 * t + 8, :]
            acc = tap if acc is None else acc + tap
        return acc                                       # (8, L) f32

    # conv_in + folded BN(eval) + Dropout(identity) + ReLU, then residual add.
    a1 = conv3x3(x, w1_ref)
    h1 = jnp.maximum(a1 * s1_ref[...] + t1_ref[...], 0.0) + x

    # conv_out + folded BN(eval) + Dropout(identity) + ReLU.
    a2 = conv3x3(h1, w2_ref)
    z = jnp.maximum(a2 * s2_ref[...] + t2_ref[...], 0.0)

    # 2x2 stride-2 max pool: neighbourhood max via 3 lane rotations, then an
    # exact one-hot selection matmul compacting the anchors lane-densely.
    pm = jnp.maximum(z, pltpu.roll(z, shift=L - 1, axis=1))
    pm = jnp.maximum(pm, pltpu.roll(z, shift=L - W, axis=1))
    pm = jnp.maximum(pm, pltpu.roll(z, shift=L - (W + 1), axis=1))
    o_ref[...] = jnp.dot(pm, sel_ref[...].astype(jnp.float32),
                         preferred_element_type=jnp.float32).astype(o_ref.dtype)


# ---------------------------------------------------------------------------
# Wrapper
# ---------------------------------------------------------------------------
def _pick_block_n(N, HW, P, budget_bytes=10 << 20):
    """Largest batch block whose estimated VMEM footprint fits (safe on v7x's
    64 MiB / v5e's 16 MiB default scoped limit), preferring a lane-dense
    (multiple-of-128) pooled-output width."""
    def footprint(bn):
        L, OUT = bn * HW, bn * P
        return (2 * _SUB * L * 4          # x block (double-buffered)
                + 2 * _SUB * OUT * 4      # out block (double-buffered)
                + 2 * 72 * L * 4          # per-tap border masks
                + 2 * L * OUT * 2         # bf16 pool-selection matrix
                + 200 * L * 4)            # in-kernel f32 temporaries (generous)
    divisors = [d for d in range(1, N + 1) if N % d == 0]
    fitting = [d for d in divisors if footprint(d) <= budget_bytes] or [1]
    return max(fitting, key=lambda d: ((d * P) % 128 == 0, d))


def residual_block(x_nchw, w1, b1, g1, be1, m1, v1,
                   w2, b2, g2, be2, m2, v2, eps=1e-5, block_n=None):
    """x_nchw: (N, Cin, H, W) float32 (PyTorch layout); conv weights in HWIO."""
    N, Cin, H, W = x_nchw.shape
    Cout = w2.shape[-1]
    assert H % 2 == 0 and W % 2 == 0, "MaxPool2d(2) needs even H, W"
    assert Cin <= _SUB and Cout <= _SUB
    HW, H2, W2 = H * W, H // 2, W // 2
    P = H2 * W2

    if block_n is None:
        block_n = _pick_block_n(N, HW, P)
    assert N % block_n == 0
    NB = N // block_n
    L, OUT = block_n * HW, block_n * P

    # Fold conv bias + BatchNorm (running stats, eval mode) into scale/shift,
    # zero-padded to the native 8-sublane height.
    def fold(b, g, be, m, v, c):
        s = g / jnp.sqrt(v + eps)
        t = be + (b - m) * s
        pad = (0, _SUB - c)
        return jnp.pad(s, pad).reshape(_SUB, 1), jnp.pad(t, pad).reshape(_SUB, 1)

    s1, t1 = fold(b1, g1, be1, m1, v1, Cin)
    s2, t2 = fold(b2, g2, be2, m2, v2, Cout)

    # Tap-blocked bf16 weights: rows [8t : 8t+8) hold w[tap t].T, zero-padded to
    # 8x8 so per-tap slices stay sublane aligned and padded channels read as 0.
    def blockify(w):
        _, _, ci, co = w.shape
        wt = jnp.transpose(w.reshape(9, ci, co), (0, 2, 1))       # (9, co, ci)
        wt = jnp.pad(wt, ((0, 0), (0, _SUB - co), (0, _SUB - ci)))
        return wt.reshape(9 * _SUB, _SUB).astype(jnp.bfloat16)

    w1_blk, w2_blk = blockify(w1), blockify(w2)

    # Host-precomputed (integer-exact) per-tap 0/1 border masks, broadcast to 8
    # sublanes and tiled across the block_n images packed along the lane dim.
    q = jnp.arange(HW, dtype=jnp.int32)
    hh, ww = q // W, q % W
    rows = []
    for t in range(9):
        ky, kx = divmod(t, 3)
        m = jnp.ones((HW,), jnp.float32)
        if ky == 0:
            m = m * (hh >= 1).astype(jnp.float32)
        if ky == 2:
            m = m * (hh <= H - 2).astype(jnp.float32)
        if kx == 0:
            m = m * (ww >= 1).astype(jnp.float32)
        if kx == 2:
            m = m * (ww <= W - 2).astype(jnp.float32)
        rows.append(m)
    mask = jnp.tile(jnp.stack(rows), (1, block_n))                 # (9, L)
    mask_blk = jnp.repeat(mask[:, None, :], _SUB, axis=1).reshape(9 * _SUB, L)

    # Exact one-hot selection: pooled lane (img*P + i*W2 + j) <- source lane
    # (img*HW + 2i*W + 2j).  Stored bf16 (0/1 exact), upcast in-kernel.
    qq = jnp.arange(P, dtype=jnp.int32)
    src = 2 * (qq // W2) * W + 2 * (qq % W2)                       # (P,)
    src = (jnp.arange(block_n, dtype=jnp.int32)[:, None] * HW
           + src[None, :]).reshape(-1)                             # (OUT,)
    sel = (jnp.arange(L, dtype=jnp.int32)[:, None] == src[None, :]
           ).astype(jnp.bfloat16)                                  # (L, OUT)

    # Pack block_n images along the lane dim: (NB, 8, block_n*HW) f32.
    x_pad = jnp.pad(x_nchw.reshape(N, Cin, HW),
                    ((0, 0), (0, _SUB - Cin), (0, 0)))
    x_packed = (x_pad.reshape(NB, block_n, _SUB, HW)
                .transpose(0, 2, 1, 3).reshape(NB, _SUB, L))

    kernel = functools.partial(_residual_block_kernel, W=W, L=L)
    out = pl.pallas_call(
        kernel,
        out_shape=jax.ShapeDtypeStruct((NB, _SUB, OUT), x_nchw.dtype),
        grid_spec=pltpu.PrefetchScalarGridSpec(
            num_scalar_prefetch=0,
            grid=(NB,),
            in_specs=[
                pl.BlockSpec((None, _SUB, L), lambda n: (n, 0, 0)),   # x
                pl.BlockSpec((9 * _SUB, _SUB), lambda n: (0, 0)),     # w1 blk
                pl.BlockSpec((9 * _SUB, _SUB), lambda n: (0, 0)),     # w2 blk
                pl.BlockSpec((_SUB, 1), lambda n: (0, 0)),            # s1
                pl.BlockSpec((_SUB, 1), lambda n: (0, 0)),            # t1
                pl.BlockSpec((_SUB, 1), lambda n: (0, 0)),            # s2
                pl.BlockSpec((_SUB, 1), lambda n: (0, 0)),            # t2
                pl.BlockSpec((9 * _SUB, L), lambda n: (0, 0)),        # tap masks
                pl.BlockSpec((L, OUT), lambda n: (0, 0)),             # pool sel
            ],
            out_specs=pl.BlockSpec((None, _SUB, OUT), lambda n: (n, 0, 0)),
        ),
        compiler_params=pltpu.CompilerParams(
            dimension_semantics=("parallel",)),
    )(x_packed, w1_blk, w2_blk, s1, t1, s2, t2, mask_blk, sel)

    # Unpack lane-packed pooled images: (NB, 8, block_n*P) -> (N, Cout, H2, W2).
    out = (out.reshape(NB, _SUB, block_n, P).transpose(0, 2, 1, 3)
           .reshape(N, _SUB, H2, W2)[:, :Cout])
    return out


# ---------------------------------------------------------------------------
# Pure-JAX NCHW reference of ResidualBlock.forward (eval mode)
# ---------------------------------------------------------------------------
def ref_forward(x, w1, b1, g1, be1, m1, v1, w2, b2, g2, be2, m2, v2, eps=1e-5):
    dn = ('NCHW', 'HWIO', 'NCHW')

    def conv_bn_relu(inp, w, b, g, be, m, v):
        y = lax.conv_general_dilated(inp, w, (1, 1), 'SAME',
                                     dimension_numbers=dn,
                                     precision=lax.Precision.HIGHEST)
        y = y + b[None, :, None, None]
        y = (y - m[None, :, None, None]) / jnp.sqrt(v[None, :, None, None] + eps)
        y = y * g[None, :, None, None] + be[None, :, None, None]
        return jnp.maximum(y, 0.0)

    h = conv_bn_relu(x, w1, b1, g1, be1, m1, v1) + x
    z = conv_bn_relu(h, w2, b2, g2, be2, m2, v2)
    N, C, H, W = z.shape
    return z.reshape(N, C, H // 2, 2, W // 2, 2).max(axis=(3, 5))


if __name__ == "__main__":
    N, Cin, Cout, H, W = 2, 4, 8, 16, 16
    key = jax.random.PRNGKey(0)
    ks = jax.random.split(key, 8)

    # PyTorch-style NCHW input (used directly by the kernel wrapper).
    x = jax.random.normal(ks[0], (N, Cin, H, W), jnp.float32)

    # Deterministic synthetic parameters (shapes per the module's __init__).
    w1 = 0.1 * jax.random.normal(ks[1], (3, 3, Cin, Cin), jnp.float32)   # HWIO
    b1 = 0.1 * jax.random.normal(ks[2], (Cin,), jnp.float32)
    g1 = 1.0 + 0.1 * jax.random.normal(ks[3], (Cin,), jnp.float32)
    be1 = 0.1 * jax.random.normal(ks[4], (Cin,), jnp.float32)
    m1 = jnp.zeros((Cin,), jnp.float32)   # BatchNorm running mean at init
    v1 = jnp.ones((Cin,), jnp.float32)    # BatchNorm running var at init

    w2 = 0.1 * jax.random.normal(ks[5], (3, 3, Cin, Cout), jnp.float32)  # HWIO
    b2 = 0.1 * jax.random.normal(ks[6], (Cout,), jnp.float32)
    g2 = 1.0 + 0.1 * jax.random.normal(ks[7], (Cout,), jnp.float32)
    be2 = jnp.zeros((Cout,), jnp.float32)
    m2 = jnp.zeros((Cout,), jnp.float32)
    v2 = jnp.ones((Cout,), jnp.float32)

    out = residual_block(x, w1, b1, g1, be1, m1, v1, w2, b2, g2, be2, m2, v2)
    out = jax.block_until_ready(out)

    ref = ref_forward(x, w1, b1, g1, be1, m1, v1, w2, b2, g2, be2, m2, v2)
    if not jnp.allclose(out, ref, atol=2e-2, rtol=2e-2):
        err = float(jnp.max(jnp.abs(out - ref)))
        raise SystemExit(f"kernel/reference mismatch, max abs err = {err}")
    print("KERNEL_OK")
</pallas_src>

<mosaic_0001>
module attributes {stable_mosaic.version = 11 : i64} {
  func.func @_residual_block_kernel(%arg0: i32, %arg1: memref<1x8x512xf32, #tpu.memory_space<vmem>>, %arg2: memref<72x8xbf16, #tpu.memory_space<vmem>>, %arg3: memref<72x8xbf16, #tpu.memory_space<vmem>>, %arg4: memref<8x1xf32, #tpu.memory_space<vmem>>, %arg5: memref<8x1xf32, #tpu.memory_space<vmem>>, %arg6: memref<8x1xf32, #tpu.memory_space<vmem>>, %arg7: memref<8x1xf32, #tpu.memory_space<vmem>>, %arg8: memref<72x512xf32, #tpu.memory_space<vmem>>, %arg9: memref<512x128xbf16, #tpu.memory_space<vmem>>, %arg10: memref<1x8x128xf32, #tpu.memory_space<vmem>>) attributes {dimension_semantics = [#tpu.dimension_semantics<parallel>], iteration_bounds = array<i64: 1>, scalar_prefetch = 0 : i64, scratch_operands = 0 : i64, tpu.core_type = #tpu.core_type<tc>, window_params = [{transform_indices = @transform_0, window_bounds = array<i64: 1, 8, 512>}, {pipeline_mode = #tpu.pipeline_mode<synchronous>, transform_indices = @transform_1, window_bounds = array<i64: 72, 8>}, {pipeline_mode = #tpu.pipeline_mode<synchronous>, transform_indices = @transform_2, window_bounds = array<i64: 72, 8>}, {pipeline_mode = #tpu.pipeline_mode<synchronous>, transform_indices = @transform_3, window_bounds = array<i64: 8, 1>}, {pipeline_mode = #tpu.pipeline_mode<synchronous>, transform_indices = @transform_4, window_bounds = array<i64: 8, 1>}, {pipeline_mode = #tpu.pipeline_mode<synchronous>, transform_indices = @transform_5, window_bounds = array<i64: 8, 1>}, {pipeline_mode = #tpu.pipeline_mode<synchronous>, transform_indices = @transform_6, window_bounds = array<i64: 8, 1>}, {pipeline_mode = #tpu.pipeline_mode<synchronous>, transform_indices = @transform_7, window_bounds = array<i64: 72, 512>}, {pipeline_mode = #tpu.pipeline_mode<synchronous>, transform_indices = @transform_8, window_bounds = array<i64: 512, 128>}, {transform_indices = @transform_9, window_bounds = array<i64: 1, 8, 128>}]} {
    %c0 = arith.constant 0 : index
    %c0_0 = arith.constant 0 : index
    %c0_1 = arith.constant 0 : index
    %0 = vector.load %arg1[%c0, %c0_0, %c0_1] : memref<1x8x512xf32, #tpu.memory_space<vmem>>, vector<1x8x512xf32>
    %1 = vector.shape_cast %0 : vector<1x8x512xf32> to vector<8x512xf32>
    %c0_2 = arith.constant 0 : index
    %c0_3 = arith.constant 0 : index
    %2 = vector.load %arg2[%c0_2, %c0_3] : memref<72x8xbf16, #tpu.memory_space<vmem>>, vector<72x8xbf16>
    %3 = arith.truncf %1 : vector<8x512xf32> to vector<8x512xbf16>
    %cst = arith.constant dense<0.000000e+00> : vector<72x512xf32>
    %4 = tpu.matmul %2, %3, %cst {dimension_numbers = #tpu.dot_dimension_numbers<[1], [0], [0], [1], [0, 0, 1, 1], [], []>} : vector<72x8xbf16>, vector<8x512xbf16>, vector<72x512xf32> -> vector<72x512xf32>
    %5 = vector.extract_strided_slice %4 {offsets = [0, 0], sizes = [8, 512], strides = [1, 1]} : vector<72x512xf32> to vector<8x512xf32>
    %c17_i32 = arith.constant 17 : i32
    %6 = tpu.dynamic_rotate %5 by %c17_i32 dim 1 : vector<8x512xf32>, i32 -> vector<8x512xf32>
    %c0_4 = arith.constant 0 : index
    %c0_5 = arith.constant 0 : index
    %7 = vector.load %arg8[%c0_4, %c0_5] : memref<72x512xf32, #tpu.memory_space<vmem>>, vector<8x512xf32>
    %8 = arith.mulf %6, %7 : vector<8x512xf32>
    %9 = vector.extract_strided_slice %4 {offsets = [8, 0], sizes = [8, 512], strides = [1, 1]} : vector<72x512xf32> to vector<8x512xf32>
    %c16_i32 = arith.constant 16 : i32
    %10 = tpu.dynamic_rotate %9 by %c16_i32 dim 1 : vector<8x512xf32>, i32 -> vector<8x512xf32>
    %c8 = arith.constant 8 : index
    %c0_6 = arith.constant 0 : index
    %11 = vector.load %arg8[%c8, %c0_6] : memref<72x512xf32, #tpu.memory_space<vmem>>, vector<8x512xf32>
    %12 = arith.mulf %10, %11 : vector<8x512xf32>
    %13 = arith.addf %8, %12 : vector<8x512xf32>
    %14 = vector.extract_strided_slice %4 {offsets = [16, 0], sizes = [8, 512], strides = [1, 1]} : vector<72x512xf32> to vector<8x512xf32>
    %c15_i32 = arith.constant 15 : i32
    %15 = tpu.dynamic_rotate %14 by %c15_i32 dim 1 : vector<8x512xf32>, i32 -> vector<8x512xf32>
    %c16 = arith.constant 16 : index
    %c0_7 = arith.constant 0 : index
    %16 = vector.load %arg8[%c16, %c0_7] : memref<72x512xf32, #tpu.memory_space<vmem>>, vector<8x512xf32>
    %17 = arith.mulf %15, %16 : vector<8x512xf32>
    %18 = arith.addf %13, %17 : vector<8x512xf32>
    %19 = vector.extract_strided_slice %4 {offsets = [24, 0], sizes = [8, 512], strides = [1, 1]} : vector<72x512xf32> to vector<8x512xf32>
    %c1_i32 = arith.constant 1 : i32
    %20 = tpu.dynamic_rotate %19 by %c1_i32 dim 1 : vector<8x512xf32>, i32 -> vector<8x512xf32>
    %c24 = arith.constant 24 : index
    %c0_8 = arith.constant 0 : index
    %21 = vector.load %arg8[%c24, %c0_8] : memref<72x512xf32, #tpu.memory_space<vmem>>, vector<8x512xf32>
    %22 = arith.mulf %20, %21 : vector<8x512xf32>
    %23 = arith.addf %18, %22 : vector<8x512xf32>
    %24 = vector.extract_strided_slice %4 {offsets = [32, 0], sizes = [8, 512], strides = [1, 1]} : vector<72x512xf32> to vector<8x512xf32>
    %25 = arith.addf %23, %24 : vector<8x512xf32>
    %26 = vector.extract_strided_slice %4 {offsets = [40, 0], sizes = [8, 512], strides = [1, 1]} : vector<72x512xf32> to vector<8x512xf32>
    %c511_i32 = arith.constant 511 : i32
    %27 = tpu.dynamic_rotate %26 by %c511_i32 dim 1 : vector<8x512xf32>, i32 -> vector<8x512xf32>
    %c40 = arith.constant 40 : index
    %c0_9 = arith.constant 0 : index
    %28 = vector.load %arg8[%c40, %c0_9] : memref<72x512xf32, #tpu.memory_space<vmem>>, vector<8x512xf32>
    %29 = arith.mulf %27, %28 : vector<8x512xf32>
    %30 = arith.addf %25, %29 : vector<8x512xf32>
    %31 = vector.extract_strided_slice %4 {offsets = [48, 0], sizes = [8, 512], strides = [1, 1]} : vector<72x512xf32> to vector<8x512xf32>
    %c497_i32 = arith.constant 497 : i32
    %32 = tpu.dynamic_rotate %31 by %c497_i32 dim 1 : vector<8x512xf32>, i32 -> vector<8x512xf32>
    %c48 = arith.constant 48 : index
    %c0_10 = arith.constant 0 : index
    %33 = vector.load %arg8[%c48, %c0_10] : memref<72x512xf32, #tpu.memory_space<vmem>>, vector<8x512xf32>
    %34 = arith.mulf %32, %33 : vector<8x512xf32>
    %35 = arith.addf %30, %34 : vector<8x512xf32>
    %36 = vector.extract_strided_slice %4 {offsets = [56, 0], sizes = [8, 512], strides = [1, 1]} : vector<72x512xf32> to vector<8x512xf32>
    %c496_i32 = arith.constant 496 : i32
    %37 = tpu.dynamic_rotate %36 by %c496_i32 dim 1 : vector<8x512xf32>, i32 -> vector<8x512xf32>
    %c56 = arith.constant 56 : index
    %c0_11 = arith.constant 0 : index
    %38 = vector.load %arg8[%c56, %c0_11] : memref<72x512xf32, #tpu.memory_space<vmem>>, vector<8x512xf32>
    %39 = arith.mulf %37, %38 : vector<8x512xf32>
    %40 = arith.addf %35, %39 : vector<8x512xf32>
    %41 = vector.extract_strided_slice %4 {offsets = [64, 0], sizes = [8, 512], strides = [1, 1]} : vector<72x512xf32> to vector<8x512xf32>
    %c495_i32 = arith.constant 495 : i32
    %42 = tpu.dynamic_rotate %41 by %c495_i32 dim 1 : vector<8x512xf32>, i32 -> vector<8x512xf32>
    %c64 = arith.constant 64 : index
    %c0_12 = arith.constant 0 : index
    %43 = vector.load %arg8[%c64, %c0_12] : memref<72x512xf32, #tpu.memory_space<vmem>>, vector<8x512xf32>
    %44 = arith.mulf %42, %43 : vector<8x512xf32>
    %45 = arith.addf %40, %44 : vector<8x512xf32>
    %c0_13 = arith.constant 0 : index
    %c0_14 = arith.constant 0 : index
    %46 = vector.load %arg4[%c0_13, %c0_14] : memref<8x1xf32, #tpu.memory_space<vmem>>, vector<8x1xf32>
    %47 = vector.broadcast %46 : vector<8x1xf32> to vector<8x512xf32>
    %48 = arith.mulf %45, %47 : vector<8x512xf32>
    %c0_15 = arith.constant 0 : index
    %c0_16 = arith.constant 0 : index
    %49 = vector.load %arg5[%c0_15, %c0_16] : memref<8x1xf32, #tpu.memory_space<vmem>>, vector<8x1xf32>
    %50 = vector.broadcast %49 : vector<8x1xf32> to vector<8x512xf32>
    %51 = arith.addf %48, %50 : vector<8x512xf32>
    %cst_17 = arith.constant 0.000000e+00 : f32
    %52 = vector.broadcast %cst_17 : f32 to vector<8x512xf32>
    %53 = arith.maximumf %51, %52 : vector<8x512xf32>
    %54 = arith.addf %53, %1 : vector<8x512xf32>
    %c0_18 = arith.constant 0 : index
    %c0_19 = arith.constant 0 : index
    %55 = vector.load %arg3[%c0_18, %c0_19] : memref<72x8xbf16, #tpu.memory_space<vmem>>, vector<72x8xbf16>
    %56 = arith.truncf %54 : vector<8x512xf32> to vector<8x512xbf16>
    %cst_20 = arith.constant dense<0.000000e+00> : vector<72x512xf32>
    %57 = tpu.matmul %55, %56, %cst_20 {dimension_numbers = #tpu.dot_dimension_numbers<[1], [0], [0], [1], [0, 0, 1, 1], [], []>} : vector<72x8xbf16>, vector<8x512xbf16>, vector<72x512xf32> -> vector<72x512xf32>
    %58 = vector.extract_strided_slice %57 {offsets = [0, 0], sizes = [8, 512], strides = [1, 1]} : vector<72x512xf32> to vector<8x512xf32>
    %c17_i32_21 = arith.constant 17 : i32
    %59 = tpu.dynamic_rotate %58 by %c17_i32_21 dim 1 : vector<8x512xf32>, i32 -> vector<8x512xf32>
    %c0_22 = arith.constant 0 : index
    %c0_23 = arith.constant 0 : index
    %60 = vector.load %arg8[%c0_22, %c0_23] : memref<72x512xf32, #tpu.memory_space<vmem>>, vector<8x512xf32>
    %61 = arith.mulf %59, %60 : vector<8x512xf32>
    %62 = vector.extract_strided_slice %57 {offsets = [8, 0], sizes = [8, 512], strides = [1, 1]} : vector<72x512xf32> to vector<8x512xf32>
    %c16_i32_24 = arith.constant 16 : i32
    %63 = tpu.dynamic_rotate %62 by %c16_i32_24 dim 1 : vector<8x512xf32>, i32 -> vector<8x512xf32>
    %c8_25 = arith.constant 8 : index
    %c0_26 = arith.constant 0 : index
    %64 = vector.load %arg8[%c8_25, %c0_26] : memref<72x512xf32, #tpu.memory_space<vmem>>, vector<8x512xf32>
    %65 = arith.mulf %63, %64 : vector<8x512xf32>
    %66 = arith.addf %61, %65 : vector<8x512xf32>
    %67 = vector.extract_strided_slice %57 {offsets = [16, 0], sizes = [8, 512], strides = [1, 1]} : vector<72x512xf32> to vector<8x512xf32>
    %c15_i32_27 = arith.constant 15 : i32
    %68 = tpu.dynamic_rotate %67 by %c15_i32_27 dim 1 : vector<8x512xf32>, i32 -> vector<8x512xf32>
    %c16_28 = arith.constant 16 : index
    %c0_29 = arith.constant 0 : index
    %69 = vector.load %arg8[%c16_28, %c0_29] : memref<72x512xf32, #tpu.memory_space<vmem>>, vector<8x512xf32>
    %70 = arith.mulf %68, %69 : vector<8x512xf32>
    %71 = arith.addf %66, %70 : vector<8x512xf32>
    %72 = vector.extract_strided_slice %57 {offsets = [24, 0], sizes = [8, 512], strides = [1, 1]} : vector<72x512xf32> to vector<8x512xf32>
    %c1_i32_30 = arith.constant 1 : i32
    %73 = tpu.dynamic_rotate %72 by %c1_i32_30 dim 1 : vector<8x512xf32>, i32 -> vector<8x512xf32>
    %c24_31 = arith.constant 24 : index
    %c0_32 = arith.constant 0 : index
    %74 = vector.load %arg8[%c24_31, %c0_32] : memref<72x512xf32, #tpu.memory_space<vmem>>, vector<8x512xf32>
    %75 = arith.mulf %73, %74 : vector<8x512xf32>
    %76 = arith.addf %71, %75 : vector<8x512xf32>
    %77 = vector.extract_strided_slice %57 {offsets = [32, 0], sizes = [8, 512], strides = [1, 1]} : vector<72x512xf32> to vector<8x512xf32>
    %78 = arith.addf %76, %77 : vector<8x512xf32>
    %79 = vector.extract_strided_slice %57 {offsets = [40, 0], sizes = [8, 512], strides = [1, 1]} : vector<72x512xf32> to vector<8x512xf32>
    %c511_i32_33 = arith.constant 511 : i32
    %80 = tpu.dynamic_rotate %79 by %c511_i32_33 dim 1 : vector<8x512xf32>, i32 -> vector<8x512xf32>
    %c40_34 = arith.constant 40 : index
    %c0_35 = arith.constant 0 : index
    %81 = vector.load %arg8[%c40_34, %c0_35] : memref<72x512xf32, #tpu.memory_space<vmem>>, vector<8x512xf32>
    %82 = arith.mulf %80, %81 : vector<8x512xf32>
    %83 = arith.addf %78, %82 : vector<8x512xf32>
    %84 = vector.extract_strided_slice %57 {offsets = [48, 0], sizes = [8, 512], strides = [1, 1]} : vector<72x512xf32> to vector<8x512xf32>
    %c497_i32_36 = arith.constant 497 : i32
    %85 = tpu.dynamic_rotate %84 by %c497_i32_36 dim 1 : vector<8x512xf32>, i32 -> vector<8x512xf32>
    %c48_37 = arith.constant 48 : index
    %c0_38 = arith.constant 0 : index
    %86 = vector.load %arg8[%c48_37, %c0_38] : memref<72x512xf32, #tpu.memory_space<vmem>>, vector<8x512xf32>
    %87 = arith.mulf %85, %86 : vector<8x512xf32>
    %88 = arith.addf %83, %87 : vector<8x512xf32>
    %89 = vector.extract_strided_slice %57 {offsets = [56, 0], sizes = [8, 512], strides = [1, 1]} : vector<72x512xf32> to vector<8x512xf32>
    %c496_i32_39 = arith.constant 496 : i32
    %90 = tpu.dynamic_rotate %89 by %c496_i32_39 dim 1 : vector<8x512xf32>, i32 -> vector<8x512xf32>
    %c56_40 = arith.constant 56 : index
    %c0_41 = arith.constant 0 : index
    %91 = vector.load %arg8[%c56_40, %c0_41] : memref<72x512xf32, #tpu.memory_space<vmem>>, vector<8x512xf32>
    %92 = arith.mulf %90, %91 : vector<8x512xf32>
    %93 = arith.addf %88, %92 : vector<8x512xf32>
    %94 = vector.extract_strided_slice %57 {offsets = [64, 0], sizes = [8, 512], strides = [1, 1]} : vector<72x512xf32> to vector<8x512xf32>
    %c495_i32_42 = arith.constant 495 : i32
    %95 = tpu.dynamic_rotate %94 by %c495_i32_42 dim 1 : vector<8x512xf32>, i32 -> vector<8x512xf32>
    %c64_43 = arith.constant 64 : index
    %c0_44 = arith.constant 0 : index
    %96 = vector.load %arg8[%c64_43, %c0_44] : memref<72x512xf32, #tpu.memory_space<vmem>>, vector<8x512xf32>
    %97 = arith.mulf %95, %96 : vector<8x512xf32>
    %98 = arith.addf %93, %97 : vector<8x512xf32>
    %c0_45 = arith.constant 0 : index
    %c0_46 = arith.constant 0 : index
    %99 = vector.load %arg6[%c0_45, %c0_46] : memref<8x1xf32, #tpu.memory_space<vmem>>, vector<8x1xf32>
    %100 = vector.broadcast %99 : vector<8x1xf32> to vector<8x512xf32>
    %101 = arith.mulf %98, %100 : vector<8x512xf32>
    %c0_47 = arith.constant 0 : index
    %c0_48 = arith.constant 0 : index
    %102 = vector.load %arg7[%c0_47, %c0_48] : memref<8x1xf32, #tpu.memory_space<vmem>>, vector<8x1xf32>
    %103 = vector.broadcast %102 : vector<8x1xf32> to vector<8x512xf32>
    %104 = arith.addf %101, %103 : vector<8x512xf32>
    %cst_49 = arith.constant 0.000000e+00 : f32
    %105 = vector.broadcast %cst_49 : f32 to vector<8x512xf32>
    %106 = arith.maximumf %104, %105 : vector<8x512xf32>
    %c511_i32_50 = arith.constant 511 : i32
    %107 = tpu.dynamic_rotate %106 by %c511_i32_50 dim 1 : vector<8x512xf32>, i32 -> vector<8x512xf32>
    %108 = arith.maximumf %106, %107 : vector<8x512xf32>
    %c496_i32_51 = arith.constant 496 : i32
    %109 = tpu.dynamic_rotate %106 by %c496_i32_51 dim 1 : vector<8x512xf32>, i32 -> vector<8x512xf32>
    %110 = arith.maximumf %108, %109 : vector<8x512xf32>
    %c495_i32_52 = arith.constant 495 : i32
    %111 = tpu.dynamic_rotate %106 by %c495_i32_52 dim 1 : vector<8x512xf32>, i32 -> vector<8x512xf32>
    %112 = arith.maximumf %110, %111 : vector<8x512xf32>
    %c0_53 = arith.constant 0 : index
    %c0_54 = arith.constant 0 : index
    %113 = vector.load %arg9[%c0_53, %c0_54] : memref<512x128xbf16, #tpu.memory_space<vmem>>, vector<512x128xbf16>
    %114 = arith.extf %113 : vector<512x128xbf16> to vector<512x128xf32>
    %cst_55 = arith.constant dense<0.000000e+00> : vector<8x128xf32>
    %115 = tpu.matmul %112, %114, %cst_55 {dimension_numbers = #tpu.dot_dimension_numbers<[1], [0], [0], [1], [0, 0, 1, 1], [], []>} : vector<8x512xf32>, vector<512x128xf32>, vector<8x128xf32> -> vector<8x128xf32>
    %c0_56 = arith.constant 0 : index
    %c0_57 = arith.constant 0 : index
    %c0_58 = arith.constant 0 : index
    %116 = vector.load %arg10[%c0_56, %c0_57, %c0_58] : memref<1x8x128xf32, #tpu.memory_space<vmem>>, vector<1x8x128xf32>
    %117 = vector.shape_cast %116 : vector<1x8x128xf32> to vector<8x128xf32>
    %118 = vector.shape_cast %115 : vector<8x128xf32> to vector<1x8x128xf32>
    tpu.vector_store %arg10[%c0_56, %c0_57, %c0_58], %118 {strides = array<i32>} : memref<1x8x128xf32, #tpu.memory_space<vmem>>, vector<1x8x128xf32>,
    return
  }
  func.func @transform_0(%arg0: i32) -> (i32, i32, i32) {
    %c0_i32 = arith.constant 0 : i32
    %c0_i32_0 = arith.constant 0 : i32
    %c0_i32_1 = arith.constant 0 : i32
    return %arg0, %c0_i32, %c0_i32_0 : i32, i32, i32
  }
  func.func @transform_1(%arg0: i32) -> (i32, i32) {
    %c0_i32 = arith.constant 0 : i32
    %c0_i32_0 = arith.constant 0 : i32
    %c0_i32_1 = arith.constant 0 : i32
    return %c0_i32, %c0_i32_0 : i32, i32
  }
  func.func @transform_2(%arg0: i32) -> (i32, i32) {
    %c0_i32 = arith.constant 0 : i32
    %c0_i32_0 = arith.constant 0 : i32
    %c0_i32_1 = arith.constant 0 : i32
    return %c0_i32, %c0_i32_0 : i32, i32
  }
  func.func @transform_3(%arg0: i32) -> (i32, i32) {
    %c0_i32 = arith.constant 0 : i32
    %c0_i32_0 = arith.constant 0 : i32
    %c0_i32_1 = arith.constant 0 : i32
    return %c0_i32, %c0_i32_0 : i32, i32
  }
  func.func @transform_4(%arg0: i32) -> (i32, i32) {
    %c0_i32 = arith.constant 0 : i32
    %c0_i32_0 = arith.constant 0 : i32
    %c0_i32_1 = arith.constant 0 : i32
    return %c0_i32, %c0_i32_0 : i32, i32
  }
  func.func @transform_5(%arg0: i32) -> (i32, i32) {
    %c0_i32 = arith.constant 0 : i32
    %c0_i32_0 = arith.constant 0 : i32
    %c0_i32_1 = arith.constant 0 : i32
    return %c0_i32, %c0_i32_0 : i32, i32
  }
  func.func @transform_6(%arg0: i32) -> (i32, i32) {
    %c0_i32 = arith.constant 0 : i32
    %c0_i32_0 = arith.constant 0 : i32
    %c0_i32_1 = arith.constant 0 : i32
    return %c0_i32, %c0_i32_0 : i32, i32
  }
  func.func @transform_7(%arg0: i32) -> (i32, i32) {
    %c0_i32 = arith.constant 0 : i32
    %c0_i32_0 = arith.constant 0 : i32
    %c0_i32_1 = arith.constant 0 : i32
    return %c0_i32, %c0_i32_0 : i32, i32
  }
  func.func @transform_8(%arg0: i32) -> (i32, i32) {
    %c0_i32 = arith.constant 0 : i32
    %c0_i32_0 = arith.constant 0 : i32
    %c0_i32_1 = arith.constant 0 : i32
    return %c0_i32, %c0_i32_0 : i32, i32
  }
  func.func @transform_9(%arg0: i32) -> (i32, i32, i32) {
    %c0_i32 = arith.constant 0 : i32
    %c0_i32_0 = arith.constant 0 : i32
    %c0_i32_1 = arith.constant 0 : i32
    return %arg0, %c0_i32, %c0_i32_0 : i32, i32, i32
  }
}

</mosaic_0001>

<llo_original>
// kernel: tpu_custom_call.1
$region0: #{tpu_custom_call.1}
  #allocation0 [shape = 'u32[]', space=smem, size = 0x4, offset = 0x4, fixed_abs, tag = 'smem constant byte address 0x4 - core index']
  #allocation1 [shape = 'u32[72,128]{1,0:T(1,128)}', space=vmem, size = 0x9000, scoped, tag = 'internal scratch']
  %s0 = inlined_call_operand.vmem [shape: f32[1,8,512], index: 0, kind: input, shape index: {}]
  %s1 = inlined_call_operand.vmem [shape: bf16[72,8], index: 1, kind: input, shape index: {}]
  %s2 = inlined_call_operand.vmem [shape: bf16[72,8], index: 2, kind: input, shape index: {}]
  %s3 = inlined_call_operand.vmem [shape: f32[8,1], index: 3, kind: input, shape index: {}]
  %s4 = inlined_call_operand.vmem [shape: f32[8,1], index: 4, kind: input, shape index: {}]
  %s5 = inlined_call_operand.vmem [shape: f32[8,1], index: 5, kind: input, shape index: {}]
  %s6 = inlined_call_operand.vmem [shape: f32[8,1], index: 6, kind: input, shape index: {}]
  %s7 = inlined_call_operand.hbm [shape: f32[72,512], index: 7, kind: input, shape index: {}]
  %s8 = inlined_call_operand.hbm [shape: bf16[512,128], index: 8, kind: input, shape index: {}]
  %s9 = inlined_call_operand.hbm [shape: f32[1,8,128], index: 9, kind: output, shape index: {}]
  %s10 = sld [smem:[#allocation0]]
  $region54: #{tpu_custom_call.1} parent=0
    _
  %s12 = ssub.s32 1, %s10
  %s13 = scalar_select 0, %s12, %s10
  $region1: #{tpu_custom_call.1} parent=0
    #allocation2 [shape = 'u8[147456]{0}', space=vmem, size = 0x24000, scoped, tag = 'input window, operand 7, single buffered']
    #allocation3 [shape = 's32[1]{0}', space=sflag, size = 0x4, scoped, tag = 'scoped memory for tpu_custom_call.1']
    #allocation4 [shape = 's32[1]{0}', space=sflag, size = 0x4, scoped, tag = 'scoped memory for tpu_custom_call.1']
    #allocation5 [shape = 'u8[131072]{0}', space=vmem, size = 0x20000, scoped, tag = 'input window, operand 8, single buffered']
    #allocation6 [shape = 's32[1]{0}', space=sflag, size = 0x4, scoped, tag = 'scoped memory for tpu_custom_call.1']
    #allocation7 [shape = 'u8[4096]{0}', space=vmem, size = 0x1000, scoped, tag = 'output window, operand 0, single buffered']
    %14 = vsyncpa [#allocation3], 0
    %15 = vsyncpa [#allocation6], 0
    %16 = vsyncpa [#allocation4], 0
    // Predicated region
    $region2: #{tpu_custom_call.1} parent=1 // pred_check
      _
    $region3: #{tpu_custom_call.1} parent=1 // pred_check_branch
      %18 = sbr.rel (0) target = $region5
    $region4: #{tpu_custom_call.1} parent=1 // pred_region
      _
    $region5: #{tpu_custom_call.1} parent=1 // pred_fallthru
      _
    // Predicated region
    $region6: #{tpu_custom_call.1} parent=1 // pred_check
      _
    $region7: #{tpu_custom_call.1} parent=1 // pred_check_branch
      %20 = sbr.rel (0) target = $region9
    $region8: #{tpu_custom_call.1} parent=1 // pred_region
      _
    $region9: #{tpu_custom_call.1} parent=1 // pred_fallthru
      _
    // Predicated region
    $region10: #{tpu_custom_call.1} parent=1 // pred_check
      _
    $region11: #{tpu_custom_call.1} parent=1 // pred_check_branch
      %22 = sbr.rel (0) target = $region13
    $region12: #{tpu_custom_call.1} parent=1 // pred_region
      _
    $region13: #{tpu_custom_call.1} parent=1 // pred_fallthru
      _
    // Predicated region
    $region14: #{tpu_custom_call.1} parent=1 // pred_check
      _
    $region15: #{tpu_custom_call.1} parent=1 // pred_check_branch
      %24 = sbr.rel (0) target = $region17
    $region16: #{tpu_custom_call.1} parent=1 // pred_region
      _
    $region17: #{tpu_custom_call.1} parent=1 // pred_fallthru
      _
    // Predicated region
    $region18: #{tpu_custom_call.1} parent=1 // pred_check
      _
    $region19: #{tpu_custom_call.1} parent=1 // pred_check_branch
      %26 = sbr.rel (0) target = $region21
    $region20: #{tpu_custom_call.1} parent=1 // pred_region
      _
    $region21: #{tpu_custom_call.1} parent=1 // pred_fallthru
      _
    // Predicated region
    $region22: #{tpu_custom_call.1} parent=1 // pred_check
      _
    $region23: #{tpu_custom_call.1} parent=1 // pred_check_branch
      %28 = sbr.rel (0) target = $region25
    $region24: #{tpu_custom_call.1} parent=1 // pred_region
      _
    $region25: #{tpu_custom_call.1} parent=1 // pred_fallthru
      _
    // Predicated region
    $region26: #{tpu_custom_call.1} parent=1 // pred_check
      _
    $region27: #{tpu_custom_call.1} parent=1 // pred_check_branch
      %30 = sbr.rel (0) target = $region29
    $region28: #{tpu_custom_call.1} parent=1 // pred_region
      _
    $region29: #{tpu_custom_call.1} parent=1 // pred_fallthru
      _
    // Predicated region
    $region30: #{tpu_custom_call.1} parent=1 // pred_check
      _
    $region31: #{tpu_custom_call.1} parent=1 // pred_check_branch
      %32 = sbr.rel (0) target = $region33
    $region32: #{tpu_custom_call.1} parent=1 // pred_region
      %34 = vsyncadd [#allocation3], 0
      %s35 = sshll.u32 %s7, 4
      %s36 = int_to_ptr.hbm [resolvable:$true] %s35
      %s37 = sshll.u32 [#allocation2], 4
      %s38 = int_to_ptr.vmem [resolvable:$true] %s37
      %43 = dma.hbm_to_vmem [thread:$0]  %s36, 4608, %s38, [#allocation3], 512, 512, 32
    $region33: #{tpu_custom_call.1} parent=1 // pred_fallthru
      _
    // Predicated region
    $region34: #{tpu_custom_call.1} parent=1 // pred_check
      _
    $region35: #{tpu_custom_call.1} parent=1 // pred_check_branch
      %45 = sbr.rel (0) target = $region37
    $region36: #{tpu_custom_call.1} parent=1 // pred_region
      %47 = vsyncadd [#allocation6], 0
      %s48 = sshll.u32 %s8, 4
      %s49 = int_to_ptr.hbm [resolvable:$true] %s48
      %s50 = sshll.u32 [#allocation5], 4
      %s51 = int_to_ptr.vmem [resolvable:$true] %s50
      %56 = dma.hbm_to_vmem [thread:$0]  %s49, 4096, %s51, [#allocation6], 64, 64, 4
    $region37: #{tpu_custom_call.1} parent=1 // pred_fallthru
      _
    // Predicated region
    $region38: #{tpu_custom_call.1} parent=1 // pred_check
      _
    $region39: #{tpu_custom_call.1} parent=1 // pred_check_branch
      %58 = sbr.rel (0) target = $region41
    $region40: #{tpu_custom_call.1} parent=1 // pred_region
      %60 = dma.done [#allocation3], 4608
    $region41: #{tpu_custom_call.1} parent=1 // pred_fallthru
      _
    // Predicated region
    $region42: #{tpu_custom_call.1} parent=1 // pred_check
      _
    $region43: #{tpu_custom_call.1} parent=1 // pred_check_branch
      %62 = sbr.rel (0) target = $region45
    $region44: #{tpu_custom_call.1} parent=1 // pred_region
      %64 = dma.done [#allocation6], 4096
    $region45: #{tpu_custom_call.1} parent=1 // pred_fallthru
      _
    %v66 = vld [vmem:[%s0] sm:$0xff]
    %v67 = vld [vmem:[%s0 + $0x8] sm:$0xff]
    %v68 = vld [vmem:[%s0 + $0x10] sm:$0xff]
    %v69 = vld [vmem:[%s0 + $0x18] sm:$0xff]
    %v70 = vld [vmem:[%s1] sm:$0xf]
    %v71 = vld [vmem:[%s1 + $0x4] sm:$0xf]
    %v72 = vld [vmem:[%s1 + $0x8] sm:$0xf]
    %v73 = vld [vmem:[%s1 + $0xc] sm:$0xf]
    %v74 = vld [vmem:[%s1 + $0x10] sm:$0xf]
    %v75 = vld [vmem:[%s1 + $0x14] sm:$0xf]
    %v76 = vld [vmem:[%s1 + $0x18] sm:$0xf]
    %v77 = vld [vmem:[%s1 + $0x1c] sm:$0xf]
    %v78 = vld [vmem:[%s1 + $0x20] sm:$0xf]
    %v79 = vpack.c.bf16 %v66, %v66
    %v80 = vpack.c.bf16 %v67, %v67
    %v81 = vpack.c.bf16 %v68, %v68
    %v82 = vpack.c.bf16 %v69, %v69
    %v92 = vunpack.c.l.b16 %v70
    %v93 = vunpack.c.l.b16 %v71
    %v94 = vunpack.c.l.b16 %v72
    %v95 = vunpack.c.l.b16 %v73
    %v96 = vunpack.c.l.b16 %v74
    %v97 = vunpack.c.l.b16 %v75
    %v98 = vunpack.c.l.b16 %v76
    %v99 = vunpack.c.l.b16 %v77
    %v100 = vunpack.c.l.b16 %v78
    %v101 = vpack.c.b16 %v93, %v92
    %v102 = vpack.c.b16 %v95, %v94
    %v103 = vpack.c.b16 %v97, %v96
    %v104 = vpack.c.b16 %v99, %v98
    %v105 = vpack.c.b16 %v100, %v100
    %vm106 = vcmask 64512
    %v108 = vsel %vm106, %v101, 0
    %v111 = vsel %vm106, %v102, 0
    %v114 = vsel %vm106, %v103, 0
    %v117 = vsel %vm106, %v104, 0
    %v120 = vsel %vm106, %v105, 0
    %vm122 = vcmask 1043456
    %v124 = vsel %vm122, %v79, 0
    %v127 = vsel %vm122, %v80, 0
    %v130 = vsel %vm122, %v81, 0
    %v133 = vsel %vm122, %v82, 0
    %135 = vmatpush.bf16.msra.mxu0 0
    %136 = vmatpush.bf16.msra.mxu0 0
    %137 = vmatpush.bf16.msra.mxu0 0
    %138 = vmatpush.bf16.msra.mxu0 0
    %139 = vmatpush.bf16.msra.mxu0 0
    %140 = vmatpush.bf16.msra.mxu0 0
    %141 = vmatpush.bf16.msra.mxu0 0
    %142 = vmatpush.bf16.msra.mxu0 %v124
    %143 = vmatmul.bf16.gmra.mxu0 %v108
    %v144 = vpop.f32.mrf.mxu0
    %v145 = vadd.f32 0.0, %v144
    %v146 = vpop.f32.mrf.mxu0
    %v147 = vadd.f32 0.0, %v146
    %148 = vmatmul.bf16.gmra.mxu0 %v111
    %v149 = vpop.f32.mrf.mxu0
    %v150 = vadd.f32 0.0, %v149
    %v151 = vpop.f32.mrf.mxu0
    %v152 = vadd.f32 0.0, %v151
    %153 = vmatmul.bf16.gmra.mxu0 %v114
    %v154 = vpop.f32.mrf.mxu0
    %v155 = vadd.f32 0.0, %v154
    %v156 = vpop.f32.mrf.mxu0
    %v157 = vadd.f32 0.0, %v156
    %158 = vmatmul.bf16.gmra.mxu0 %v117
    %v159 = vpop.f32.mrf.mxu0
    %v160 = vadd.f32 0.0, %v159
    %v161 = vpop.f32.mrf.mxu0
    %v162 = vadd.f32 0.0, %v161
    %163 = vmatmul.bf16.gmra.mxu0 %v120
    %v164 = vpop.f32.mrf.mxu0
    %v165 = vadd.f32 0.0, %v164
    %v166 = vpop.f32.mrf.mxu0
    %167 = vdwg.mxu0
    %168 = vmatpush.bf16.msra.mxu0 0
    %169 = vmatpush.bf16.msra.mxu0 0
    %170 = vmatpush.bf16.msra.mxu0 0
    %171 = vmatpush.bf16.msra.mxu0 0
    %172 = vmatpush.bf16.msra.mxu0 0
    %173 = vmatpush.bf16.msra.mxu0 0
    %174 = vmatpush.bf16.msra.mxu0 0
    %175 = vmatpush.bf16.msra.mxu0 %v127
    %176 = vmatmul.bf16.gmra.mxu0 %v108
    %v177 = vpop.f32.mrf.mxu0
    %v178 = vadd.f32 0.0, %v177
    %v179 = vpop.f32.mrf.mxu0
    %v180 = vadd.f32 0.0, %v179
    %181 = vmatmul.bf16.gmra.mxu0 %v111
    %v182 = vpop.f32.mrf.mxu0
    %v183 = vadd.f32 0.0, %v182
    %v184 = vpop.f32.mrf.mxu0
    %v185 = vadd.f32 0.0, %v184
    %186 = vmatmul.bf16.gmra.mxu0 %v114
    %v187 = vpop.f32.mrf.mxu0
    %v188 = vadd.f32 0.0, %v187
    %v189 = vpop.f32.mrf.mxu0
    %v190 = vadd.f32 0.0, %v189
    %191 = vmatmul.bf16.gmra.mxu0 %v117
    %v192 = vpop.f32.mrf.mxu0
    %v193 = vadd.f32 0.0, %v192
    %v194 = vpop.f32.mrf.mxu0
    %v195 = vadd.f32 0.0, %v194
    %196 = vmatmul.bf16.gmra.mxu0 %v120
    %v197 = vpop.f32.mrf.mxu0
    %v198 = vadd.f32 0.0, %v197
    %v199 = vpop.f32.mrf.mxu0
    %200 = vdwg.mxu0
    %201 = vmatpush.bf16.msra.mxu0 0
    %202 = vmatpush.bf16.msra.mxu0 0
    %203 = vmatpush.bf16.msra.mxu0 0
    %204 = vmatpush.bf16.msra.mxu0 0
    %205 = vmatpush.bf16.msra.mxu0 0
    %206 = vmatpush.bf16.msra.mxu0 0
    %207 = vmatpush.bf16.msra.mxu0 0
    %208 = vmatpush.bf16.msra.mxu0 %v130
    %209 = vmatmul.bf16.gmra.mxu0 %v108
    %v210 = vpop.f32.mrf.mxu0
    %v211 = vadd.f32 0.0, %v210
    %v212 = vpop.f32.mrf.mxu0
    %v213 = vadd.f32 0.0, %v212
    %214 = vmatmul.bf16.gmra.mxu0 %v111
    %v215 = vpop.f32.mrf.mxu0
    %v216 = vadd.f32 0.0, %v215
    %v217 = vpop.f32.mrf.mxu0
    %v218 = vadd.f32 0.0, %v217
    %219 = vmatmul.bf16.gmra.mxu0 %v114
    %v220 = vpop.f32.mrf.mxu0
    %v221 = vadd.f32 0.0, %v220
    %v222 = vpop.f32.mrf.mxu0
    %v223 = vadd.f32 0.0, %v222
    %224 = vmatmul.bf16.gmra.mxu0 %v117
    %v225 = vpop.f32.mrf.mxu0
    %v226 = vadd.f32 0.0, %v225
    %v227 = vpop.f32.mrf.mxu0
    %v228 = vadd.f32 0.0, %v227
    %229 = vmatmul.bf16.gmra.mxu0 %v120
    %v230 = vpop.f32.mrf.mxu0
    %v231 = vadd.f32 0.0, %v230
    %v232 = vpop.f32.mrf.mxu0
    %233 = vdwg.mxu0
    %234 = vmatpush.bf16.msra.mxu0 0
    %235 = vmatpush.bf16.msra.mxu0 0
    %236 = vmatpush.bf16.msra.mxu0 0
    %237 = vmatpush.bf16.msra.mxu0 0
    %238 = vmatpush.bf16.msra.mxu0 0
    %239 = vmatpush.bf16.msra.mxu0 0
    %240 = vmatpush.bf16.msra.mxu0 0
    %241 = vmatpush.bf16.msra.mxu0 %v133
    %242 = vmatmul.bf16.gmra.mxu0 %v108
    %v243 = vpop.f32.mrf.mxu0
    %v244 = vadd.f32 0.0, %v243
    %v245 = vpop.f32.mrf.mxu0
    %v246 = vadd.f32 0.0, %v245
    %247 = vmatmul.bf16.gmra.mxu0 %v111
    %v248 = vpop.f32.mrf.mxu0
    %v249 = vadd.f32 0.0, %v248
    %v250 = vpop.f32.mrf.mxu0
    %v251 = vadd.f32 0.0, %v250
    %252 = vmatmul.bf16.gmra.mxu0 %v114
    %v253 = vpop.f32.mrf.mxu0
    %v254 = vadd.f32 0.0, %v253
    %v255 = vpop.f32.mrf.mxu0
    %v256 = vadd.f32 0.0, %v255
    %257 = vmatmul.bf16.gmra.mxu0 %v117
    %v258 = vpop.f32.mrf.mxu0
    %v259 = vadd.f32 0.0, %v258
    %v260 = vpop.f32.mrf.mxu0
    %v261 = vadd.f32 0.0, %v260
    %262 = vmatmul.bf16.gmra.mxu0 %v120
    %v263 = vpop.f32.mrf.mxu0
    %v264 = vadd.f32 0.0, %v263
    %v265 = vpop.f32.mrf.mxu0
    %266 = vdwg.mxu0
    %267 = vrot.lane.b32.xlu0 %v145, 17
    %v268 = vpop.permute.xlu0 %267
    %269 = vrot.lane.b32.xlu0 %v178, 17
    %v270 = vpop.permute.xlu0 %269
    %271 = vrot.lane.b32.xlu0 %v211, 17
    %v272 = vpop.permute.xlu0 %271
    %273 = vrot.lane.b32.xlu0 %v244, 17
    %v274 = vpop.permute.xlu0 %273
    %v275 = vlaneseq
    %v276 = vand.u32 %v275, 127
    %vm277 = vcmp.lt.s32.totalorder %v276, 17
    %v278 = vsel %vm277, %v272, %v274
    %v279 = vsel %vm277, %v270, %v272
    %v280 = vsel %vm277, %v268, %v270
    %v281 = vsel %vm277, %v274, %v268
    %v282 = vld [vmem:[#allocation2] sm:$0xff]
    %v283 = vld [vmem:[#allocation2 + $0x8] sm:$0xff]
    %v284 = vld [vmem:[#allocation2 + $0x10] sm:$0xff]
    %v285 = vld [vmem:[#allocation2 + $0x18] sm:$0xff]
    %v286 = vmul.f32 %v281, %v282
    %v287 = vmul.f32 %v280, %v283
    %v288 = vmul.f32 %v279, %v284
    %v289 = vmul.f32 %v278, %v285
    %290 = vrot.lane.b32.xlu0 %v147, 16
    %v291 = vpop.permute.xlu0 %290
    %292 = vrot.lane.b32.xlu0 %v180, 16
    %v293 = vpop.permute.xlu0 %292
    %294 = vrot.lane.b32.xlu0 %v213, 16
    %v295 = vpop.permute.xlu0 %294
    %296 = vrot.lane.b32.xlu0 %v246, 16
    %v297 = vpop.permute.xlu0 %296
    %vm298 = vcmp.lt.s32.totalorder %v276, 16
    %v299 = vsel %vm298, %v295, %v297
    %v300 = vsel %vm298, %v293, %v295
    %v301 = vsel %vm298, %v291, %v293
    %v302 = vsel %vm298, %v297, %v291
    %v303 = vld [vmem:[#allocation2 + $0x20] sm:$0xff]
    %v304 = vld [vmem:[#allocation2 + $0x28] sm:$0xff]
    %v305 = vld [vmem:[#allocation2 + $0x30] sm:$0xff]
    %v306 = vld [vmem:[#allocation2 + $0x38] sm:$0xff]
    %v307 = vmul.f32 %v302, %v303
    %v308 = vmul.f32 %v301, %v304
    %v309 = vmul.f32 %v300, %v305
    %v310 = vmul.f32 %v299, %v306
    %v311 = vadd.f32 %v286, %v307
    %v312 = vadd.f32 %v287, %v308
    %v313 = vadd.f32 %v288, %v309
    %v314 = vadd.f32 %v289, %v310
    %315 = vrot.lane.b32.xlu0 %v150, 15
    %v316 = vpop.permute.xlu0 %315
    %317 = vrot.lane.b32.xlu0 %v183, 15
    %v318 = vpop.permute.xlu0 %317
    %319 = vrot.lane.b32.xlu0 %v216, 15
    %v320 = vpop.permute.xlu0 %319
    %321 = vrot.lane.b32.xlu0 %v249, 15
    %v322 = vpop.permute.xlu0 %321
    %vm323 = vcmp.lt.s32.totalorder %v276, 15
    %v324 = vsel %vm323, %v320, %v322
    %v325 = vsel %vm323, %v318, %v320
    %v326 = vsel %vm323, %v316, %v318
    %v327 = vsel %vm323, %v322, %v316
    %v328 = vld [vmem:[#allocation2 + $0x40] sm:$0xff]
    %v329 = vld [vmem:[#allocation2 + $0x48] sm:$0xff]
    %v330 = vld [vmem:[#allocation2 + $0x50] sm:$0xff]
    %v331 = vld [vmem:[#allocation2 + $0x58] sm:$0xff]
    %v332 = vmul.f32 %v327, %v328
    %v333 = vmul.f32 %v326, %v329
    %v334 = vmul.f32 %v325, %v330
    %v335 = vmul.f32 %v324, %v331
    %v336 = vadd.f32 %v311, %v332
    %v337 = vadd.f32 %v312, %v333
    %v338 = vadd.f32 %v313, %v334
    %v339 = vadd.f32 %v314, %v335
    %340 = vrot.lane.b32.xlu0 %v152, 1
    %v341 = vpop.permute.xlu0 %340
    %342 = vrot.lane.b32.xlu0 %v185, 1
    %v343 = vpop.permute.xlu0 %342
    %344 = vrot.lane.b32.xlu0 %v218, 1
    %v345 = vpop.permute.xlu0 %344
    %346 = vrot.lane.b32.xlu0 %v251, 1
    %v347 = vpop.permute.xlu0 %346
    %vm348 = vcmp.lt.s32.totalorder %v276, 1
    %v349 = vsel %vm348, %v345, %v347
    %v350 = vsel %vm348, %v343, %v345
    %v351 = vsel %vm348, %v341, %v343
    %v352 = vsel %vm348, %v347, %v341
    %v353 = vld [vmem:[#allocation2 + $0x60] sm:$0xff]
    %v354 = vld [vmem:[#allocation2 + $0x68] sm:$0xff]
    %v355 = vld [vmem:[#allocation2 + $0x70] sm:$0xff]
    %v356 = vld [vmem:[#allocation2 + $0x78] sm:$0xff]
    %v357 = vmul.f32 %v352, %v353
    %v358 = vmul.f32 %v351, %v354
    %v359 = vmul.f32 %v350, %v355
    %v360 = vmul.f32 %v349, %v356
    %v361 = vadd.f32 %v336, %v357
    %v362 = vadd.f32 %v337, %v358
    %v363 = vadd.f32 %v338, %v359
    %v364 = vadd.f32 %v339, %v360
    %v365 = vadd.f32 %v361, %v155
    %v366 = vadd.f32 %v362, %v188
    %v367 = vadd.f32 %v363, %v221
    %v368 = vadd.f32 %v364, %v254
    %369 = vrot.lane.b32.xlu0 %v157, 127
    %v370 = vpop.permute.xlu0 %369
    %371 = vrot.lane.b32.xlu0 %v190, 127
    %v372 = vpop.permute.xlu0 %371
    %373 = vrot.lane.b32.xlu0 %v223, 127
    %v374 = vpop.permute.xlu0 %373
    %375 = vrot.lane.b32.xlu0 %v256, 127
    %v376 = vpop.permute.xlu0 %375
    %vm377 = vcmp.lt.s32.totalorder %v276, 127
    %v378 = vsel %vm377, %v374, %v376
    %v379 = vsel %vm377, %v372, %v374
    %v380 = vsel %vm377, %v370, %v372
    %v381 = vsel %vm377, %v376, %v370
    %v382 = vld [vmem:[#allocation2 + $0xa0] sm:$0xff]
    %v383 = vld [vmem:[#allocation2 + $0xa8] sm:$0xff]
    %v384 = vld [vmem:[#allocation2 + $0xb0] sm:$0xff]
    %v385 = vld [vmem:[#allocation2 + $0xb8] sm:$0xff]
    %v386 = vmul.f32 %v380, %v382
    %v387 = vmul.f32 %v379, %v383
    %v388 = vmul.f32 %v378, %v384
    %v389 = vmul.f32 %v381, %v385
    %v390 = vadd.f32 %v365, %v386
    %v391 = vadd.f32 %v366, %v387
    %v392 = vadd.f32 %v367, %v388
    %v393 = vadd.f32 %v368, %v389
    %394 = vrot.lane.b32.xlu0 %v160, 113
    %v395 = vpop.permute.xlu0 %394
    %396 = vrot.lane.b32.xlu0 %v193, 113
    %v397 = vpop.permute.xlu0 %396
    %398 = vrot.lane.b32.xlu0 %v226, 113
    %v399 = vpop.permute.xlu0 %398
    %400 = vrot.lane.b32.xlu0 %v259, 113
    %v401 = vpop.permute.xlu0 %400
    %vm402 = vcmp.lt.s32.totalorder %v276, 113
    %v403 = vsel %vm402, %v399, %v401
    %v404 = vsel %vm402, %v397, %v399
    %v405 = vsel %vm402, %v395, %v397
    %v406 = vsel %vm402, %v401, %v395
    %v407 = vld [vmem:[#allocation2 + $0xc0] sm:$0xff]
    %v408 = vld [vmem:[#allocation2 + $0xc8] sm:$0xff]
    %v409 = vld [vmem:[#allocation2 + $0xd0] sm:$0xff]
    %v410 = vld [vmem:[#allocation2 + $0xd8] sm:$0xff]
    %v411 = vmul.f32 %v405, %v407
    %v412 = vmul.f32 %v404, %v408
    %v413 = vmul.f32 %v403, %v409
    %v414 = vmul.f32 %v406, %v410
    %v415 = vadd.f32 %v390, %v411
    %v416 = vadd.f32 %v391, %v412
    %v417 = vadd.f32 %v392, %v413
    %v418 = vadd.f32 %v393, %v414
    %419 = vrot.lane.b32.xlu0 %v162, 112
    %v420 = vpop.permute.xlu0 %419
    %421 = vrot.lane.b32.xlu0 %v195, 112
    %v422 = vpop.permute.xlu0 %421
    %423 = vrot.lane.b32.xlu0 %v228, 112
    %v424 = vpop.permute.xlu0 %423
    %425 = vrot.lane.b32.xlu0 %v261, 112
    %v426 = vpop.permute.xlu0 %425
    %vm427 = vcmp.lt.s32.totalorder %v276, 112
    %v428 = vsel %vm427, %v424, %v426
    %v429 = vsel %vm427, %v422, %v424
    %v430 = vsel %vm427, %v420, %v422
    %v431 = vsel %vm427, %v426, %v420
    %v432 = vld [vmem:[#allocation2 + $0xe0] sm:$0xff]
    %v433 = vld [vmem:[#allocation2 + $0xe8] sm:$0xff]
    %v434 = vld [vmem:[#allocation2 + $0xf0] sm:$0xff]
    %v435 = vld [vmem:[#allocation2 + $0xf8] sm:$0xff]
    %v436 = vmul.f32 %v430, %v432
    %v437 = vmul.f32 %v429, %v433
    %v438 = vmul.f32 %v428, %v434
    %v439 = vmul.f32 %v431, %v435
    %v440 = vadd.f32 %v415, %v436
    %v441 = vadd.f32 %v416, %v437
    %v442 = vadd.f32 %v417, %v438
    %v443 = vadd.f32 %v418, %v439
    %444 = vrot.lane.b32.xlu0 %v165, 111
    %v445 = vpop.permute.xlu0 %444
    %446 = vrot.lane.b32.xlu0 %v198, 111
    %v447 = vpop.permute.xlu0 %446
    %448 = vrot.lane.b32.xlu0 %v231, 111
    %v449 = vpop.permute.xlu0 %448
    %450 = vrot.lane.b32.xlu0 %v264, 111
    %v451 = vpop.permute.xlu0 %450
    %vm452 = vcmp.lt.s32.totalorder %v276, 111
    %v453 = vsel %vm452, %v449, %v451
    %v454 = vsel %vm452, %v447, %v449
    %v455 = vsel %vm452, %v445, %v447
    %v456 = vsel %vm452, %v451, %v445
    %v457 = vld [vmem:[#allocation2 + $0x100] sm:$0xff]
    %v458 = vld [vmem:[#allocation2 + $0x108] sm:$0xff]
    %v459 = vld [vmem:[#allocation2 + $0x110] sm:$0xff]
    %v460 = vld [vmem:[#allocation2 + $0x118] sm:$0xff]
    %v461 = vmul.f32 %v455, %v457
    %v462 = vmul.f32 %v454, %v458
    %v463 = vmul.f32 %v453, %v459
    %v464 = vmul.f32 %v456, %v460
    %v465 = vadd.f32 %v440, %v461
    %v466 = vadd.f32 %v441, %v462
    %v467 = vadd.f32 %v442, %v463
    %v468 = vadd.f32 %v443, %v464
    %v469 = vld [vmem:[%s3] sm:$0xff]
    %471 = vset.pattern.permute.xlu0 0
    %472 = vperm.xlu0 %471, %v469
    %v473 = vpop.permute.xlu0 %472
    %v475 = vmul.f32 %v465, %v473
    %v476 = vmul.f32 %v466, %v473
    %v477 = vmul.f32 %v467, %v473
    %v478 = vmul.f32 %v468, %v473
    %v479 = vld [vmem:[%s4] sm:$0xff]
    %481 = vset.pattern.permute.xlu0 0
    %482 = vperm.xlu0 %481, %v479
    %v483 = vpop.permute.xlu0 %482
    %v485 = vadd.f32 %v475, %v483
    %v486 = vadd.f32 %v476, %v483
    %v487 = vadd.f32 %v477, %v483
    %v488 = vadd.f32 %v478, %v483
    %v489 = vmax.f32 %v485, 0.0
    %v490 = vmax.f32 %v486, 0.0
    %v491 = vmax.f32 %v487, 0.0
    %v492 = vmax.f32 %v488, 0.0
    %v493 = vadd.f32 %v489, %v66
    %v494 = vadd.f32 %v490, %v67
    %v495 = vadd.f32 %v491, %v68
    %v496 = vadd.f32 %v492, %v69
    %v497 = vld [vmem:[%s2] sm:$0xf]
    %v498 = vld [vmem:[%s2 + $0x4] sm:$0xf]
    %v499 = vld [vmem:[%s2 + $0x8] sm:$0xf]
    %v500 = vld [vmem:[%s2 + $0xc] sm:$0xf]
    %v501 = vld [vmem:[%s2 + $0x10] sm:$0xf]
    %v502 = vld [vmem:[%s2 + $0x14] sm:$0xf]
    %v503 = vld [vmem:[%s2 + $0x18] sm:$0xf]
    %v504 = vld [vmem:[%s2 + $0x1c] sm:$0xf]
    %v505 = vld [vmem:[%s2 + $0x20] sm:$0xf]
    %v506 = vpack.c.bf16 %v493, %v493
    %v507 = vpack.c.bf16 %v494, %v494
    %v508 = vpack.c.bf16 %v495, %v495
    %v509 = vpack.c.bf16 %v496, %v496
    %v519 = vunpack.c.l.b16 %v497
    %v520 = vunpack.c.l.b16 %v498
    %v521 = vunpack.c.l.b16 %v499
    %v522 = vunpack.c.l.b16 %v500
    %v523 = vunpack.c.l.b16 %v501
    %v524 = vunpack.c.l.b16 %v502
    %v525 = vunpack.c.l.b16 %v503
    %v526 = vunpack.c.l.b16 %v504
    %v527 = vunpack.c.l.b16 %v505
    %v528 = vpack.c.b16 %v520, %v519
    %v529 = vpack.c.b16 %v522, %v521
    %v530 = vpack.c.b16 %v524, %v523
    %v531 = vpack.c.b16 %v526, %v525
    %v532 = vpack.c.b16 %v527, %v527
    %v534 = vsel %vm106, %v528, 0
    %v537 = vsel %vm106, %v529, 0
    %v540 = vsel %vm106, %v530, 0
    %v543 = vsel %vm106, %v531, 0
    %v546 = vsel %vm106, %v532, 0
    %v549 = vsel %vm122, %v506, 0
    %v552 = vsel %vm122, %v507, 0
    %v555 = vsel %vm122, %v508, 0
    %v558 = vsel %vm122, %v509, 0
    %560 = vmatpush.bf16.msra.mxu0 0
    %561 = vmatpush.bf16.msra.mxu0 0
    %562 = vmatpush.bf16.msra.mxu0 0
    %563 = vmatpush.bf16.msra.mxu0 0
    %564 = vmatpush.bf16.msra.mxu0 0
    %565 = vmatpush.bf16.msra.mxu0 0
    %566 = vmatpush.bf16.msra.mxu0 0
    %567 = vmatpush.bf16.msra.mxu0 %v549
    %568 = vmatmul.bf16.gmra.mxu0 %v534
    %v569 = vpop.f32.mrf.mxu0
    %v570 = vadd.f32 0.0, %v569
    %v571 = vpop.f32.mrf.mxu0
    %v572 = vadd.f32 0.0, %v571
    %573 = vmatmul.bf16.gmra.mxu0 %v537
    %v574 = vpop.f32.mrf.mxu0
    %v575 = vadd.f32 0.0, %v574
    %v576 = vpop.f32.mrf.mxu0
    %v577 = vadd.f32 0.0, %v576
    %578 = vmatmul.bf16.gmra.mxu0 %v540
    %v579 = vpop.f32.mrf.mxu0
    %v580 = vadd.f32 0.0, %v579
    %v581 = vpop.f32.mrf.mxu0
    %v582 = vadd.f32 0.0, %v581
    %583 = vmatmul.bf16.gmra.mxu0 %v543
    %v584 = vpop.f32.mrf.mxu0
    %v585 = vadd.f32 0.0, %v584
    %v586 = vpop.f32.mrf.mxu0
    %v587 = vadd.f32 0.0, %v586
    %588 = vmatmul.bf16.gmra.mxu0 %v546
    %v589 = vpop.f32.mrf.mxu0
    %v590 = vadd.f32 0.0, %v589
    %v591 = vpop.f32.mrf.mxu0
    %592 = vdwg.mxu0
    %593 = vmatpush.bf16.msra.mxu0 0
    %594 = vmatpush.bf16.msra.mxu0 0
    %595 = vmatpush.bf16.msra.mxu0 0
    %596 = vmatpush.bf16.msra.mxu0 0
    %597 = vmatpush.bf16.msra.mxu0 0
    %598 = vmatpush.bf16.msra.mxu0 0
    %599 = vmatpush.bf16.msra.mxu0 0
    %600 = vmatpush.bf16.msra.mxu0 %v552
    %601 = vmatmul.bf16.gmra.mxu0 %v534
    %v602 = vpop.f32.mrf.mxu0
    %v603 = vadd.f32 0.0, %v602
    %v604 = vpop.f32.mrf.mxu0
    %v605 = vadd.f32 0.0, %v604
    %606 = vmatmul.bf16.gmra.mxu0 %v537
    %v607 = vpop.f32.mrf.mxu0
    %v608 = vadd.f32 0.0, %v607
    %v609 = vpop.f32.mrf.mxu0
    %v610 = vadd.f32 0.0, %v609
    %611 = vmatmul.bf16.gmra.mxu0 %v540
    %v612 = vpop.f32.mrf.mxu0
    %v613 = vadd.f32 0.0, %v612
    %v614 = vpop.f32.mrf.mxu0
    %v615 = vadd.f32 0.0, %v614
    %616 = vmatmul.bf16.gmra.mxu0 %v543
    %v617 = vpop.f32.mrf.mxu0
    %v618 = vadd.f32 0.0, %v617
    %v619 = vpop.f32.mrf.mxu0
    %v620 = vadd.f32 0.0, %v619
    %621 = vmatmul.bf16.gmra.mxu0 %v546
    %v622 = vpop.f32.mrf.mxu0
    %v623 = vadd.f32 0.0, %v622
    %v624 = vpop.f32.mrf.mxu0
    %625 = vdwg.mxu0
    %626 = vmatpush.bf16.msra.mxu0 0
    %627 = vmatpush.bf16.msra.mxu0 0
    %628 = vmatpush.bf16.msra.mxu0 0
    %629 = vmatpush.bf16.msra.mxu0 0
    %630 = vmatpush.bf16.msra.mxu0 0
    %631 = vmatpush.bf16.msra.mxu0 0
    %632 = vmatpush.bf16.msra.mxu0 0
    %633 = vmatpush.bf16.msra.mxu0 %v555
    %634 = vmatmul.bf16.gmra.mxu0 %v534
    %v635 = vpop.f32.mrf.mxu0
    %v636 = vadd.f32 0.0, %v635
    %v637 = vpop.f32.mrf.mxu0
    %v638 = vadd.f32 0.0, %v637
    %639 = vmatmul.bf16.gmra.mxu0 %v537
    %v640 = vpop.f32.mrf.mxu0
    %v641 = vadd.f32 0.0, %v640
    %v642 = vpop.f32.mrf.mxu0
    %v643 = vadd.f32 0.0, %v642
    %644 = vmatmul.bf16.gmra.mxu0 %v540
    %v645 = vpop.f32.mrf.mxu0
    %v646 = vadd.f32 0.0, %v645
    %v647 = vpop.f32.mrf.mxu0
    %v648 = vadd.f32 0.0, %v647
    %649 = vmatmul.bf16.gmra.mxu0 %v543
    %v650 = vpop.f32.mrf.mxu0
    %v651 = vadd.f32 0.0, %v650
    %v652 = vpop.f32.mrf.mxu0
    %v653 = vadd.f32 0.0, %v652
    %654 = vmatmul.bf16.gmra.mxu0 %v546
    %v655 = vpop.f32.mrf.mxu0
    %v656 = vadd.f32 0.0, %v655
    %v657 = vpop.f32.mrf.mxu0
    %658 = vdwg.mxu0
    %659 = vmatpush.bf16.msra.mxu0 0
    %660 = vmatpush.bf16.msra.mxu0 0
    %661 = vmatpush.bf16.msra.mxu0 0
    %662 = vmatpush.bf16.msra.mxu0 0
    %663 = vmatpush.bf16.msra.mxu0 0
    %664 = vmatpush.bf16.msra.mxu0 0
    %665 = vmatpush.bf16.msra.mxu0 0
    %666 = vmatpush.bf16.msra.mxu0 %v558
    %667 = vmatmul.bf16.gmra.mxu0 %v534
    %v668 = vpop.f32.mrf.mxu0
    %v669 = vadd.f32 0.0, %v668
    %v670 = vpop.f32.mrf.mxu0
    %v671 = vadd.f32 0.0, %v670
    %672 = vmatmul.bf16.gmra.mxu0 %v537
    %v673 = vpop.f32.mrf.mxu0
    %v674 = vadd.f32 0.0, %v673
    %v675 = vpop.f32.mrf.mxu0
    %v676 = vadd.f32 0.0, %v675
    %677 = vmatmul.bf16.gmra.mxu0 %v540
    %v678 = vpop.f32.mrf.mxu0
    %v679 = vadd.f32 0.0, %v678
    %v680 = vpop.f32.mrf.mxu0
    %v681 = vadd.f32 0.0, %v680
    %682 = vmatmul.bf16.gmra.mxu0 %v543
    %v683 = vpop.f32.mrf.mxu0
    %v684 = vadd.f32 0.0, %v683
    %v685 = vpop.f32.mrf.mxu0
    %v686 = vadd.f32 0.0, %v685
    %687 = vmatmul.bf16.gmra.mxu0 %v546
    %v688 = vpop.f32.mrf.mxu0
    %v689 = vadd.f32 0.0, %v688
    %v690 = vpop.f32.mrf.mxu0
    %691 = vdwg.mxu0
    %692 = vrot.lane.b32.xlu0 %v570, 17
    %v693 = vpop.permute.xlu0 %692
    %694 = vrot.lane.b32.xlu0 %v603, 17
    %v695 = vpop.permute.xlu0 %694
    %696 = vrot.lane.b32.xlu0 %v636, 17
    %v697 = vpop.permute.xlu0 %696
    %698 = vrot.lane.b32.xlu0 %v669, 17
    %v699 = vpop.permute.xlu0 %698
    %v700 = vsel %vm277, %v697, %v699
    %v701 = vsel %vm277, %v695, %v697
    %v702 = vsel %vm277, %v693, %v695
    %v703 = vsel %vm277, %v699, %v693
    %v704 = vmul.f32 %v703, %v282
    %v705 = vmul.f32 %v702, %v283
    %v706 = vmul.f32 %v701, %v284
    %v707 = vmul.f32 %v700, %v285
    %708 = vrot.lane.b32.xlu0 %v572, 16
    %v709 = vpop.permute.xlu0 %708
    %710 = vrot.lane.b32.xlu0 %v605, 16
    %v711 = vpop.permute.xlu0 %710
    %712 = vrot.lane.b32.xlu0 %v638, 16
    %v713 = vpop.permute.xlu0 %712
    %714 = vrot.lane.b32.xlu0 %v671, 16
    %v715 = vpop.permute.xlu0 %714
    %v716 = vsel %vm298, %v713, %v715
    %v717 = vsel %vm298, %v711, %v713
    %v718 = vsel %vm298, %v709, %v711
    %v719 = vsel %vm298, %v715, %v709
    %v720 = vmul.f32 %v719, %v303
    %v721 = vmul.f32 %v718, %v304
    %v722 = vmul.f32 %v717, %v305
    %v723 = vmul.f32 %v716, %v306
    %v724 = vadd.f32 %v704, %v720
    %v725 = vadd.f32 %v705, %v721
    %v726 = vadd.f32 %v706, %v722
    %v727 = vadd.f32 %v707, %v723
    %728 = vrot.lane.b32.xlu0 %v575, 15
    %v729 = vpop.permute.xlu0 %728
    %730 = vrot.lane.b32.xlu0 %v608, 15
    %v731 = vpop.permute.xlu0 %730
    %732 = vrot.lane.b32.xlu0 %v641, 15
    %v733 = vpop.permute.xlu0 %732
    %734 = vrot.lane.b32.xlu0 %v674, 15
    %v735 = vpop.permute.xlu0 %734
    %v736 = vsel %vm323, %v733, %v735
    %v737 = vsel %vm323, %v731, %v733
    %v738 = vsel %vm323, %v729, %v731
    %v739 = vsel %vm323, %v735, %v729
    %v740 = vmul.f32 %v739, %v328
    %v741 = vmul.f32 %v738, %v329
    %v742 = vmul.f32 %v737, %v330
    %v743 = vmul.f32 %v736, %v331
    %v744 = vadd.f32 %v724, %v740
    %v745 = vadd.f32 %v725, %v741
    %v746 = vadd.f32 %v726, %v742
    %v747 = vadd.f32 %v727, %v743
    %748 = vrot.lane.b32.xlu0 %v577, 1
    %v749 = vpop.permute.xlu0 %748
    %750 = vrot.lane.b32.xlu0 %v610, 1
    %v751 = vpop.permute.xlu0 %750
    %752 = vrot.lane.b32.xlu0 %v643, 1
    %v753 = vpop.permute.xlu0 %752
    %754 = vrot.lane.b32.xlu0 %v676, 1
    %v755 = vpop.permute.xlu0 %754
    %v756 = vsel %vm348, %v753, %v755
    %v757 = vsel %vm348, %v751, %v753
    %v758 = vsel %vm348, %v749, %v751
    %v759 = vsel %vm348, %v755, %v749
    %v760 = vmul.f32 %v759, %v353
    %v761 = vmul.f32 %v758, %v354
    %v762 = vmul.f32 %v757, %v355
    %v763 = vmul.f32 %v756, %v356
    %v764 = vadd.f32 %v744, %v760
    %v765 = vadd.f32 %v745, %v761
    %v766 = vadd.f32 %v746, %v762
    %v767 = vadd.f32 %v747, %v763
    %v768 = vadd.f32 %v764, %v580
    %v769 = vadd.f32 %v765, %v613
    %v770 = vadd.f32 %v766, %v646
    %v771 = vadd.f32 %v767, %v679
    %772 = vrot.lane.b32.xlu0 %v582, 127
    %v773 = vpop.permute.xlu0 %772
    %774 = vrot.lane.b32.xlu0 %v615, 127
    %v775 = vpop.permute.xlu0 %774
    %776 = vrot.lane.b32.xlu0 %v648, 127
    %v777 = vpop.permute.xlu0 %776
    %778 = vrot.lane.b32.xlu0 %v681, 127
    %v779 = vpop.permute.xlu0 %778
    %v780 = vsel %vm377, %v777, %v779
    %v781 = vsel %vm377, %v775, %v777
    %v782 = vsel %vm377, %v773, %v775
    %v783 = vsel %vm377, %v779, %v773
    %v784 = vmul.f32 %v782, %v382
    %v785 = vmul.f32 %v781, %v383
    %v786 = vmul.f32 %v780, %v384
    %v787 = vmul.f32 %v783, %v385
    %v788 = vadd.f32 %v768, %v784
    %v789 = vadd.f32 %v769, %v785
    %v790 = vadd.f32 %v770, %v786
    %v791 = vadd.f32 %v771, %v787
    %792 = vrot.lane.b32.xlu0 %v585, 113
    %v793 = vpop.permute.xlu0 %792
    %794 = vrot.lane.b32.xlu0 %v618, 113
    %v795 = vpop.permute.xlu0 %794
    %796 = vrot.lane.b32.xlu0 %v651, 113
    %v797 = vpop.permute.xlu0 %796
    %798 = vrot.lane.b32.xlu0 %v684, 113
    %v799 = vpop.permute.xlu0 %798
    %v800 = vsel %vm402, %v797, %v799
    %v801 = vsel %vm402, %v795, %v797
    %v802 = vsel %vm402, %v793, %v795
    %v803 = vsel %vm402, %v799, %v793
    %v804 = vmul.f32 %v802, %v407
    %v805 = vmul.f32 %v801, %v408
    %v806 = vmul.f32 %v800, %v409
    %v807 = vmul.f32 %v803, %v410
    %v808 = vadd.f32 %v788, %v804
    %v809 = vadd.f32 %v789, %v805
    %v810 = vadd.f32 %v790, %v806
    %v811 = vadd.f32 %v791, %v807
    %812 = vrot.lane.b32.xlu0 %v587, 112
    %v813 = vpop.permute.xlu0 %812
    %814 = vrot.lane.b32.xlu0 %v620, 112
    %v815 = vpop.permute.xlu0 %814
    %816 = vrot.lane.b32.xlu0 %v653, 112
    %v817 = vpop.permute.xlu0 %816
    %818 = vrot.lane.b32.xlu0 %v686, 112
    %v819 = vpop.permute.xlu0 %818
    %v820 = vsel %vm427, %v817, %v819
    %v821 = vsel %vm427, %v815, %v817
    %v822 = vsel %vm427, %v813, %v815
    %v823 = vsel %vm427, %v819, %v813
    %v824 = vmul.f32 %v822, %v432
    %v825 = vmul.f32 %v821, %v433
    %v826 = vmul.f32 %v820, %v434
    %v827 = vmul.f32 %v823, %v435
    %v828 = vadd.f32 %v808, %v824
    %v829 = vadd.f32 %v809, %v825
    %v830 = vadd.f32 %v810, %v826
    %v831 = vadd.f32 %v811, %v827
    %832 = vrot.lane.b32.xlu0 %v590, 111
    %v833 = vpop.permute.xlu0 %832
    %834 = vrot.lane.b32.xlu0 %v623, 111
    %v835 = vpop.permute.xlu0 %834
    %836 = vrot.lane.b32.xlu0 %v656, 111
    %v837 = vpop.permute.xlu0 %836
    %838 = vrot.lane.b32.xlu0 %v689, 111
    %v839 = vpop.permute.xlu0 %838
    %v840 = vsel %vm452, %v837, %v839
    %v841 = vsel %vm452, %v835, %v837
    %v842 = vsel %vm452, %v833, %v835
    %v843 = vsel %vm452, %v839, %v833
    %v844 = vmul.f32 %v842, %v457
    %v845 = vmul.f32 %v841, %v458
    %v846 = vmul.f32 %v840, %v459
    %v847 = vmul.f32 %v843, %v460
    %v848 = vadd.f32 %v828, %v844
    %v849 = vadd.f32 %v829, %v845
    %v850 = vadd.f32 %v830, %v846
    %v851 = vadd.f32 %v831, %v847
    %v852 = vld [vmem:[%s5] sm:$0xff]
    %854 = vset.pattern.permute.xlu0 0
    %855 = vperm.xlu0 %854, %v852
    %v856 = vpop.permute.xlu0 %855
    %v858 = vmul.f32 %v848, %v856
    %v859 = vmul.f32 %v849, %v856
    %v860 = vmul.f32 %v850, %v856
    %v861 = vmul.f32 %v851, %v856
    %v862 = vld [vmem:[%s6] sm:$0xff]
    %864 = vset.pattern.permute.xlu0 0
    %865 = vperm.xlu0 %864, %v862
    %v866 = vpop.permute.xlu0 %865
    %v868 = vadd.f32 %v858, %v866
    %v869 = vadd.f32 %v859, %v866
    %v870 = vadd.f32 %v860, %v866
    %v871 = vadd.f32 %v861, %v866
    %v872 = vmax.f32 %v868, 0.0
    %v873 = vmax.f32 %v869, 0.0
    %v874 = vmax.f32 %v870, 0.0
    %v875 = vmax.f32 %v871, 0.0
    %876 = vrot.lane.b32.xlu0 %v872, 127
    %v877 = vpop.permute.xlu0 %876
    %878 = vrot.lane.b32.xlu0 %v873, 127
    %v879 = vpop.permute.xlu0 %878
    %880 = vrot.lane.b32.xlu0 %v874, 127
    %v881 = vpop.permute.xlu0 %880
    %882 = vrot.lane.b32.xlu0 %v875, 127
    %v883 = vpop.permute.xlu0 %882
    %v884 = vsel %vm377, %v881, %v883
    %v885 = vsel %vm377, %v879, %v881
    %v886 = vsel %vm377, %v877, %v879
    %v887 = vsel %vm377, %v883, %v877
    %v888 = vmax.f32 %v872, %v886
    %v889 = vmax.f32 %v873, %v885
    %v890 = vmax.f32 %v874, %v884
    %v891 = vmax.f32 %v875, %v887
    %892 = vrot.lane.b32.xlu0 %v872, 112
    %v893 = vpop.permute.xlu0 %892
    %894 = vrot.lane.b32.xlu0 %v873, 112
    %v895 = vpop.permute.xlu0 %894
    %896 = vrot.lane.b32.xlu0 %v874, 112
    %v897 = vpop.permute.xlu0 %896
    %898 = vrot.lane.b32.xlu0 %v875, 112
    %v899 = vpop.permute.xlu0 %898
    %v900 = vsel %vm427, %v897, %v899
    %v901 = vsel %vm427, %v895, %v897
    %v902 = vsel %vm427, %v893, %v895
    %v903 = vsel %vm427, %v899, %v893
    %v904 = vmax.f32 %v888, %v902
    %v905 = vmax.f32 %v889, %v901
    %v906 = vmax.f32 %v890, %v900
    %v907 = vmax.f32 %v891, %v903
    %908 = vrot.lane.b32.xlu0 %v872, 111
    %v909 = vpop.permute.xlu0 %908
    %910 = vrot.lane.b32.xlu0 %v873, 111
    %v911 = vpop.permute.xlu0 %910
    %912 = vrot.lane.b32.xlu0 %v874, 111
    %v913 = vpop.permute.xlu0 %912
    %914 = vrot.lane.b32.xlu0 %v875, 111
    %v915 = vpop.permute.xlu0 %914
    %v916 = vsel %vm452, %v913, %v915
    %v917 = vsel %vm452, %v911, %v913
    %v918 = vsel %vm452, %v909, %v911
    %v919 = vsel %vm452, %v915, %v909
    %v920 = vmax.f32 %v904, %v918
    %v921 = vmax.f32 %v905, %v917
    %v922 = vmax.f32 %v906, %v916
    %v923 = vmax.f32 %v907, %v919
    %v924 = vld [vmem:[#allocation5] sm:$0xf]
    %v925 = vld [vmem:[#allocation5 + $0x4] sm:$0xf]
    %v926 = vld [vmem:[#allocation5 + $0x8] sm:$0xf]
    %v927 = vld [vmem:[#allocation5 + $0xc] sm:$0xf]
    %v928 = vld [vmem:[#allocation5 + $0x10] sm:$0xf]
    %v929 = vld [vmem:[#allocation5 + $0x14] sm:$0xf]
    %v930 = vld [vmem:[#allocation5 + $0x18] sm:$0xf]
    %v931 = vld [vmem:[#allocation5 + $0x1c] sm:$0xf]
    %v932 = vld [vmem:[#allocation5 + $0x20] sm:$0xf]
    %v933 = vld [vmem:[#allocation5 + $0x24] sm:$0xf]
    %v934 = vld [vmem:[#allocation5 + $0x28] sm:$0xf]
    %v935 = vld [vmem:[#allocation5 + $0x2c] sm:$0xf]
    %v936 = vld [vmem:[#allocation5 + $0x30] sm:$0xf]
    %v937 = vld [vmem:[#allocation5 + $0x34] sm:$0xf]
    %v938 = vld [vmem:[#allocation5 + $0x38] sm:$0xf]
    %v939 = vld [vmem:[#allocation5 + $0x3c] sm:$0xf]
    %v940 = vld [vmem:[#allocation5 + $0x40] sm:$0xf]
    %v941 = vld [vmem:[#allocation5 + $0x44] sm:$0xf]
    %v942 = vld [vmem:[#allocation5 + $0x48] sm:$0xf]
    %v943 = vld [vmem:[#allocation5 + $0x4c] sm:$0xf]
    %v944 = vld [vmem:[#allocation5 + $0x50] sm:$0xf]
    %v945 = vld [vmem:[#allocation5 + $0x54] sm:$0xf]
    %v946 = vld [vmem:[#allocation5 + $0x58] sm:$0xf]
    %v947 = vld [vmem:[#allocation5 + $0x5c] sm:$0xf]
    %v948 = vld [vmem:[#allocation5 + $0x60] sm:$0xf]
    %v949 = vld [vmem:[#allocation5 + $0x64] sm:$0xf]
    %v950 = vld [vmem:[#allocation5 + $0x68] sm:$0xf]
    %v951 = vld [vmem:[#allocation5 + $0x6c] sm:$0xf]
    %v952 = vld [vmem:[#allocation5 + $0x70] sm:$0xf]
    %v953 = vld [vmem:[#allocation5 + $0x74] sm:$0xf]
    %v954 = vld [vmem:[#allocation5 + $0x78] sm:$0xf]
    %v955 = vld [vmem:[#allocation5 + $0x7c] sm:$0xf]
    %v956 = vld [vmem:[#allocation5 + $0x80] sm:$0xf]
    %v957 = vld [vmem:[#allocation5 + $0x84] sm:$0xf]
    %v958 = vld [vmem:[#allocation5 + $0x88] sm:$0xf]
    %v959 = vld [vmem:[#allocation5 + $0x8c] sm:$0xf]
    %v960 = vld [vmem:[#allocation5 + $0x90] sm:$0xf]
    %v961 = vld [vmem:[#allocation5 + $0x94] sm:$0xf]
    %v962 = vld [vmem:[#allocation5 + $0x98] sm:$0xf]
    %v963 = vld [vmem:[#allocation5 + $0x9c] sm:$0xf]
    %v964 = vld [vmem:[#allocation5 + $0xa0] sm:$0xf]
    %v965 = vld [vmem:[#allocation5 + $0xa4] sm:$0xf]
    %v966 = vld [vmem:[#allocation5 + $0xa8] sm:$0xf]
    %v967 = vld [vmem:[#allocation5 + $0xac] sm:$0xf]
    %v968 = vld [vmem:[#allocation5 + $0xb0] sm:$0xf]
    %v969 = vld [vmem:[#allocation5 + $0xb4] sm:$0xf]
    %v970 = vld [vmem:[#allocation5 + $0xb8] sm:$0xf]
    %v971 = vld [vmem:[#allocation5 + $0xbc] sm:$0xf]
    %v972 = vld [vmem:[#allocation5 + $0xc0] sm:$0xf]
    %v973 = vld [vmem:[#allocation5 + $0xc4] sm:$0xf]
    %v974 = vld [vmem:[#allocation5 + $0xc8] sm:$0xf]
    %v975 = vld [vmem:[#allocation5 + $0xcc] sm:$0xf]
    %v976 = vld [vmem:[#allocation5 + $0xd0] sm:$0xf]
    %v977 = vld [vmem:[#allocation5 + $0xd4] sm:$0xf]
    %v978 = vld [vmem:[#allocation5 + $0xd8] sm:$0xf]
    %v979 = vld [vmem:[#allocation5 + $0xdc] sm:$0xf]
    %v980 = vld [vmem:[#allocation5 + $0xe0] sm:$0xf]
    %v981 = vld [vmem:[#allocation5 + $0xe4] sm:$0xf]
    %v982 = vld [vmem:[#allocation5 + $0xe8] sm:$0xf]
    %v983 = vld [vmem:[#allocation5 + $0xec] sm:$0xf]
    %v984 = vld [vmem:[#allocation5 + $0xf0] sm:$0xf]
    %v985 = vld [vmem:[#allocation5 + $0xf4] sm:$0xf]
    %v986 = vld [vmem:[#allocation5 + $0xf8] sm:$0xf]
    %v987 = vld [vmem:[#allocation5 + $0xfc] sm:$0xf]
    %v988 = vunpack.c.l.bf16 %v924
    %v989 = vunpack.c.l.bf16 %v925
    %v990 = vunpack.c.l.bf16 %v926
    %v991 = vunpack.c.l.bf16 %v927
    %v992 = vunpack.c.l.bf16 %v928
    %v993 = vunpack.c.l.bf16 %v929
    %v994 = vunpack.c.l.bf16 %v930
    %v995 = vunpack.c.l.bf16 %v931
    %v996 = vunpack.c.l.bf16 %v932
    %v997 = vunpack.c.l.bf16 %v933
    %v998 = vunpack.c.l.bf16 %v934
    %v999 = vunpack.c.l.bf16 %v935
    %v1000 = vunpack.c.l.bf16 %v936
    %v1001 = vunpack.c.l.bf16 %v937
    %v1002 = vunpack.c.l.bf16 %v938
    %v1003 = vunpack.c.l.bf16 %v939
    %v1004 = vunpack.c.l.bf16 %v940
    %v1005 = vunpack.c.l.bf16 %v941
    %v1006 = vunpack.c.l.bf16 %v942
    %v1007 = vunpack.c.l.bf16 %v943
    %v1008 = vunpack.c.l.bf16 %v944
    %v1009 = vunpack.c.l.bf16 %v945
    %v1010 = vunpack.c.l.bf16 %v946
    %v1011 = vunpack.c.l.bf16 %v947
    %v1012 = vunpack.c.l.bf16 %v948
    %v1013 = vunpack.c.l.bf16 %v949
    %v1014 = vunpack.c.l.bf16 %v950
    %v1015 = vunpack.c.l.bf16 %v951
    %v1016 = vunpack.c.l.bf16 %v952
    %v1017 = vunpack.c.l.bf16 %v953
    %v1018 = vunpack.c.l.bf16 %v954
    %v1019 = vunpack.c.l.bf16 %v955
    %v1020 = vunpack.c.l.bf16 %v956
    %v1021 = vunpack.c.l.bf16 %v957
    %v1022 = vunpack.c.l.bf16 %v958
    %v1023 = vunpack.c.l.bf16 %v959
    %v1024 = vunpack.c.l.bf16 %v960
    %v1025 = vunpack.c.l.bf16 %v961
    %v1026 = vunpack.c.l.bf16 %v962
    %v1027 = vunpack.c.l.bf16 %v963
    %v1028 = vunpack.c.l.bf16 %v964
    %v1029 = vunpack.c.l.bf16 %v965
    %v1030 = vunpack.c.l.bf16 %v966
    %v1031 = vunpack.c.l.bf16 %v967
    %v1032 = vunpack.c.l.bf16 %v968
    %v1033 = vunpack.c.l.bf16 %v969
    %v1034 = vunpack.c.l.bf16 %v970
    %v1035 = vunpack.c.l.bf16 %v971
    %v1036 = vunpack.c.l.bf16 %v972
    %v1037 = vunpack.c.l.bf16 %v973
    %v1038 = vunpack.c.l.bf16 %v974
    %v1039 = vunpack.c.l.bf16 %v975
    %v1040 = vunpack.c.l.bf16 %v976
    %v1041 = vunpack.c.l.bf16 %v977
    %v1042 = vunpack.c.l.bf16 %v978
    %v1043 = vunpack.c.l.bf16 %v979
    %v1044 = vunpack.c.l.bf16 %v980
    %v1045 = vunpack.c.l.bf16 %v981
    %v1046 = vunpack.c.l.bf16 %v982
    %v1047 = vunpack.c.l.bf16 %v983
    %v1048 = vunpack.c.l.bf16 %v984
    %v1049 = vunpack.c.l.bf16 %v985
    %v1050 = vunpack.c.l.bf16 %v986
    %v1051 = vunpack.c.l.bf16 %v987
    %1052 = vmatpush.msra.mxu0 %v1003
    %1053 = vmatpush.msra.mxu0 %v1002
    %1054 = vmatpush.msra.mxu0 %v1001
    %1055 = vmatpush.msra.mxu0 %v1000
    %1056 = vmatpush.msra.mxu0 %v999
    %1057 = vmatpush.msra.mxu0 %v998
    %1058 = vmatpush.msra.mxu0 %v997
    %1059 = vmatpush.msra.mxu0 %v996
    %1060 = vmatpush.msra.mxu0 %v995
    %1061 = vmatpush.msra.mxu0 %v994
    %1062 = vmatpush.msra.mxu0 %v993
    %1063 = vmatpush.msra.mxu0 %v992
    %1064 = vmatpush.msra.mxu0 %v991
    %1065 = vmatpush.msra.mxu0 %v990
    %1066 = vmatpush.msra.mxu0 %v989
    %1067 = vmatpush.msra.mxu0 %v988
    %1068 = vmatmul.f32.gmra.mxu0 %v920
    %v1069 = vpop.f32.mrf.mxu0
    %v1070 = vadd.f32 0.0, %v1069
    %1071 = vdwg.mxu0
    %1072 = vmatpush.msra.mxu0 %v1019
    %1073 = vmatpush.msra.mxu0 %v1018
    %1074 = vmatpush.msra.mxu0 %v1017
    %1075 = vmatpush.msra.mxu0 %v1016
    %1076 = vmatpush.msra.mxu0 %v1015
    %1077 = vmatpush.msra.mxu0 %v1014
    %1078 = vmatpush.msra.mxu0 %v1013
    %1079 = vmatpush.msra.mxu0 %v1012
    %1080 = vmatpush.msra.mxu0 %v1011
    %1081 = vmatpush.msra.mxu0 %v1010
    %1082 = vmatpush.msra.mxu0 %v1009
    %1083 = vmatpush.msra.mxu0 %v1008
    %1084 = vmatpush.msra.mxu0 %v1007
    %1085 = vmatpush.msra.mxu0 %v1006
    %1086 = vmatpush.msra.mxu0 %v1005
    %1087 = vmatpush.msra.mxu0 %v1004
    %1088 = vmatmul.f32.gmra.mxu0 %v921
    %v1089 = vpop.f32.mrf.mxu0
    %v1090 = vadd.f32 %v1070, %v1089
    %1091 = vdwg.mxu0
    %1092 = vmatpush.msra.mxu0 %v1035
    %1093 = vmatpush.msra.mxu0 %v1034
    %1094 = vmatpush.msra.mxu0 %v1033
    %1095 = vmatpush.msra.mxu0 %v1032
    %1096 = vmatpush.msra.mxu0 %v1031
    %1097 = vmatpush.msra.mxu0 %v1030
    %1098 = vmatpush.msra.mxu0 %v1029
    %1099 = vmatpush.msra.mxu0 %v1028
    %1100 = vmatpush.msra.mxu0 %v1027
    %1101 = vmatpush.msra.mxu0 %v1026
    %1102 = vmatpush.msra.mxu0 %v1025
    %1103 = vmatpush.msra.mxu0 %v1024
    %1104 = vmatpush.msra.mxu0 %v1023
    %1105 = vmatpush.msra.mxu0 %v1022
    %1106 = vmatpush.msra.mxu0 %v1021
    %1107 = vmatpush.msra.mxu0 %v1020
    %1108 = vmatmul.f32.gmra.mxu0 %v922
    %v1109 = vpop.f32.mrf.mxu0
    %v1110 = vadd.f32 %v1090, %v1109
    %1111 = vdwg.mxu0
    %1112 = vmatpush.msra.mxu0 %v1051
    %1113 = vmatpush.msra.mxu0 %v1050
    %1114 = vmatpush.msra.mxu0 %v1049
    %1115 = vmatpush.msra.mxu0 %v1048
    %1116 = vmatpush.msra.mxu0 %v1047
    %1117 = vmatpush.msra.mxu0 %v1046
    %1118 = vmatpush.msra.mxu0 %v1045
    %1119 = vmatpush.msra.mxu0 %v1044
    %1120 = vmatpush.msra.mxu0 %v1043
    %1121 = vmatpush.msra.mxu0 %v1042
    %1122 = vmatpush.msra.mxu0 %v1041
    %1123 = vmatpush.msra.mxu0 %v1040
    %1124 = vmatpush.msra.mxu0 %v1039
    %1125 = vmatpush.msra.mxu0 %v1038
    %1126 = vmatpush.msra.mxu0 %v1037
    %1127 = vmatpush.msra.mxu0 %v1036
    %1128 = vmatmul.f32.gmra.mxu0 %v923
    %v1129 = vpop.f32.mrf.mxu0
    %v1130 = vadd.f32 %v1110, %v1129
    %1131 = vdwg.mxu0
    %1132 = vst [vmem:[#allocation7] sm:$0xff] %v1130
    // Predicated region
    $region46: #{tpu_custom_call.1} parent=1 // pred_check
      _
    $region47: #{tpu_custom_call.1} parent=1 // pred_check_branch
      %1134 = sbr.rel (0) target = $region49
    $region48: #{tpu_custom_call.1} parent=1 // pred_region
      %1136 = vsyncadd [#allocation4], 0
      %s1138 = sshll.u32 [#allocation7], 4
      %s1139 = int_to_ptr.vmem [resolvable:$true] %s1138
      %s1140 = sshll.u32 %s9, 4
      %s1141 = int_to_ptr.hbm [resolvable:$true] %s1140
      %1143 = dma.vmem_to_hbm [thread:$0]  %s1139, 128, %s1141, [#allocation4]
    $region49: #{tpu_custom_call.1} parent=1 // pred_fallthru
      _
    // Predicated region
    $region50: #{tpu_custom_call.1} parent=1 // pred_check
      _
    $region51: #{tpu_custom_call.1} parent=1 // pred_check_branch
      %1145 = sbr.rel (0) target = $region53
    $region52: #{tpu_custom_call.1} parent=1 // pred_region
      %1147 = dma.done [#allocation4], 128
    $region53: #{tpu_custom_call.1} parent=1 // pred_fallthru
      _
    %1148 = vsyncpa [#allocation3], 1
    %1149 = vsyncpa [#allocation6], 1
    %1150 = vsyncpa [#allocation4], 1

</llo_original>
